<compile_context>
chip_gen: v5e
topology: v5e:2x2
jax: 0.10.0
libtpu: 0.0.40
codegen_flags: <defaults>
</compile_context>

<pallas_src>
import math

import jax
import jax.numpy as jnp
from jax.experimental import pallas as pl
from jax.experimental.pallas import tpu as pltpu

# ----------------------------- hyper-parameters -----------------------------
BATCH = 2
SEQ_LEN = 16        # seq_len / max_len
N_FEATURES = 4      # input feature dim
D_MODEL = 32
N_HEADS = 4
HEAD_DIM = D_MODEL // N_HEADS
N_HIDDEN = 64       # dim_feedforward (single encoder layer, n_hidden='64')
N_OUTPUT = 8
LN_EPS = 1e-5
OUT_LANES = 128     # lane-dense output slab width
NEG_INF = -1e30     # additive mask value (row-max is subtracted before exp)


# ------------------------------ in-kernel math ------------------------------
def _erf(x):
    # Exact-GELU needs erf; Abramowitz & Stegun 7.1.26 rational approximation
    # (|err| < 1.5e-7, i.e. float32-exact).  Kept in f32 (v5e has no bf16 VPU).
    z = jnp.abs(x)
    t = 1.0 / (1.0 + 0.3275911 * z)
    poly = ((((1.061405429 * t - 1.453152027) * t + 1.421413741) * t
             - 0.284496736) * t + 0.254829592) * t
    y = 1.0 - poly * jnp.exp(-z * z)
    return jnp.where(x < 0.0, -y, y)


def _gelu(x):
    # torch.nn.GELU(approximate='none'): 0.5 * x * (1 + erf(x / sqrt(2)))
    return 0.5 * x * (1.0 + _erf(x * (1.0 / math.sqrt(2.0))))


def _layer_norm(x, w, b):
    mu = jnp.mean(x, axis=-1, keepdims=True)
    var = jnp.mean(jnp.square(x - mu), axis=-1, keepdims=True)
    return (x - mu) * jax.lax.rsqrt(var + LN_EPS) * w + b


def _round8(n):
    return ((n + 7) // 8) * 8


# --------------------------------- kernel -----------------------------------
def _make_kernel(BB, offs):
    T, F, D = SEQ_LEN, N_FEATURES, D_MODEL
    H, Dh, HF = N_HEADS, HEAD_DIM, N_HIDDEN
    BT = BB * T          # sublane rows processed per grid step
    LA = H * BT          # lane width of the block-diagonal attention slabs

    def kernel(x_ref, p_ref, out_ref):
        # --- TokenEmbedding (circular Conv1d k=3 as matmul) + fixed pos-enc ---
        wc = p_ref[offs["wc"]:offs["wc"] + 3 * F, :D]                # (3F, D)
        pe = p_ref[offs["pe"]:offs["pe"] + BT, :D]                   # (BT, D)
        x = jnp.dot(x_ref[...], wc,
                    preferred_element_type=jnp.float32) + pe         # (BT, D)

        # --- fused QKV projection: one 2-D matmul (q pre-scaled by 1/sqrt(Dh)) ---
        wqkv = p_ref[offs["qkv"]:offs["qkv"] + D, :3 * D]            # (D, 3D)
        bqkv = p_ref[offs["qkv"] + D:offs["qkv"] + D + 1, :3 * D]    # (1, 3D)
        qkv = jnp.dot(x, wqkv, preferred_element_type=jnp.float32) + bqkv
        q = qkv[:, 0:D]          # heads are column blocks of width Dh
        k = qkv[:, D:2 * D]
        v = qkv[:, 2 * D:3 * D]

        # --- block-diagonal, lane-dense multi-head attention -----------------
        # K_bd/V_bd (LA, D): row block h holds K/V masked to head-h columns.
        cm = p_ref[offs["cm"]:offs["cm"] + LA, :D]                   # (LA, D)
        k_bd = jnp.concatenate([k] * H, axis=0) * cm                 # (LA, D)
        v_bd = jnp.concatenate([v] * H, axis=0) * cm                 # (LA, D)

        # S[i, h*BT+j] = q_h[i] . k_h[j]  (single NT matmul, lane-dense scores)
        s = jax.lax.dot_general(q, k_bd, (((1,), (1,)), ((), ())),
                                preferred_element_type=jnp.float32)  # (BT, LA)
        if BB > 1:
            # additive block-diagonal mask keeps attention inside each of the
            # BB batch elements folded into this slab
            s = s + p_ref[offs["am"]:offs["am"] + BT, :LA]
        # row-global max is a valid per-head stabilizer; keep the subtraction
        s = s - jnp.max(s, axis=-1, keepdims=True)
        pexp = jnp.exp(s)
        # per-head denominators via one MXU pass (result already lane-broadcast)
        ones_bd = p_ref[offs["ones"]:offs["ones"] + LA, :LA]         # (LA, LA)
        denom = jnp.dot(pexp, ones_bd, preferred_element_type=jnp.float32)
        pnrm = pexp * pl.reciprocal(denom, approx=True)
        # O lands directly in concat-head layout (BT, D)
        o = jnp.dot(pnrm, v_bd, preferred_element_type=jnp.float32)

        vec = p_ref[offs["vec"]:offs["vec"] + 6, :D]  # [bo;ln1w;ln1b;b2;ln2w;ln2b]
        wo = p_ref[offs["wo"]:offs["wo"] + D, :D]                    # (D, D)
        attn = jnp.dot(o, wo, preferred_element_type=jnp.float32) + vec[0:1]

        # residual + LayerNorm1 (post-norm)
        x = _layer_norm(x + attn, vec[1:2], vec[2:3])

        # --- feed-forward: linear2(GELU(linear1(x))) --------------------------
        w1 = p_ref[offs["w1"]:offs["w1"] + D, :HF]
        b1 = p_ref[offs["w1"] + D:offs["w1"] + D + 1, :HF]
        hdn = _gelu(jnp.dot(x, w1, preferred_element_type=jnp.float32) + b1)
        w2 = p_ref[offs["w2"]:offs["w2"] + HF, :D]
        ff = jnp.dot(hdn, w2, preferred_element_type=jnp.float32) + vec[3:4]

        # residual + LayerNorm2
        x = _layer_norm(x + ff, vec[4:5], vec[5:6])

        # --- last timestep per batch element, GELU, output layer --------------
        sel = p_ref[offs["sel"]:offs["sel"] + BB, :BT]     # (BB, BT) one-hot
        last = jnp.dot(sel, x, preferred_element_type=jnp.float32)   # (BB, D)
        y = _gelu(last)
        wout = p_ref[offs["out"]:offs["out"] + D, :OUT_LANES]        # (D, 128)
        out_ref[0] = jnp.dot(y, wout, preferred_element_type=jnp.float32)

    return kernel


# ------------------------------ wrapper helpers ------------------------------
def _batch_block(batch):
    """Batch elements folded into one kernel block.

    Fold as much batch as possible (the kernel is launch/cadence-bound), but
    keep BB*T <= 256 so the attention slabs stay small.  On v7x split across
    the two TensorCores only when each core still gets >= 128 sublane rows.
    """
    T = SEQ_LEN
    try:
        kind = jax.devices()[0].device_kind.lower()
    except Exception:
        kind = ""
    bb = batch
    while bb > 1 and (bb * T > 256 or batch % bb):
        bb -= 1
    if ("v7" in kind or "7x" in kind) and bb % 2 == 0 and (bb // 2) * T >= 128:
        bb //= 2
    return bb


def _pack_params(p, BB):
    """Pack ALL parameters + precomputed masks into one 128-lane 2-D slab."""
    T, F, D = SEQ_LEN, N_FEATURES, D_MODEL
    H, Dh, HF, O = N_HEADS, HEAD_DIM, N_HIDDEN, N_OUTPUT
    BT = BB * T
    LA = H * BT
    LW = max(OUT_LANES, LA, 3 * D)

    offs = {}
    row = 0

    def alloc(name, nrows):
        nonlocal row
        offs[name] = row
        row = _round8(row + nrows)

    alloc("wc", 3 * F)
    alloc("pe", BT)
    alloc("qkv", D + 1)
    alloc("wo", D)
    alloc("cm", LA)
    if BB > 1:
        alloc("am", BT)
    alloc("ones", LA)
    alloc("w1", D + 1)
    alloc("w2", HF)
    alloc("vec", 6)
    alloc("sel", BB)
    alloc("out", D)
    rows = row

    def put(sl, off, block):
        r, c = block.shape
        return sl.at[off:off + r, :c].set(block.astype(jnp.float32))

    slab = jnp.zeros((rows, LW), jnp.float32)
    slab = put(slab, offs["wc"], p["wc"])
    slab = put(slab, offs["pe"], jnp.tile(p["pe"], (BB, 1)))

    scale = 1.0 / math.sqrt(Dh)
    wqkv = jnp.concatenate([p["wq"] * scale, p["wk"], p["wv"]], axis=1)  # (D, 3D)
    bqkv = jnp.concatenate([p["bq"] * scale, p["bk"], p["bv"]], axis=1)  # (1, 3D)
    slab = put(slab, offs["qkv"], jnp.concatenate([wqkv, bqkv], axis=0))
    slab = put(slab, offs["wo"], p["wo"])

    head_row = jnp.arange(LA) // BT
    head_col = jnp.arange(D) // Dh
    colmask = (head_row[:, None] == head_col[None, :]).astype(jnp.float32)
    slab = put(slab, offs["cm"], colmask)

    if BB > 1:
        bid_q = jnp.arange(BT) // T
        bid_k = (jnp.arange(LA) % BT) // T
        addmask = jnp.where(bid_q[:, None] == bid_k[None, :], 0.0, NEG_INF)
        slab = put(slab, offs["am"], addmask.astype(jnp.float32))

    ones_bd = (head_row[:, None] == head_row[None, :]).astype(jnp.float32)
    slab = put(slab, offs["ones"], ones_bd)

    slab = put(slab, offs["w1"], jnp.concatenate([p["w1"], p["b1"]], axis=0))
    slab = put(slab, offs["w2"], p["w2"])
    vecs = jnp.concatenate([p["bo"], p["ln1_w"], p["ln1_b"],
                            p["b2"], p["ln2_w"], p["ln2_b"]], axis=0)   # (6, D)
    slab = put(slab, offs["vec"], vecs)

    sel = jnp.zeros((BB, BT), jnp.float32)
    sel = sel.at[jnp.arange(BB), jnp.arange(BB) * T + (T - 1)].set(1.0)
    slab = put(slab, offs["sel"], sel)

    wout = jnp.zeros((D, OUT_LANES), jnp.float32).at[:, :O].set(p["wout"])
    slab = put(slab, offs["out"], wout)
    return slab, offs


# --------------------------------- wrapper ----------------------------------
def ts_transformer_encoder(X, params):
    """X: (B, T, F) float32 -> (B, N_OUTPUT) float32 (padding_masks=None path)."""
    # TODO(synk): padding_masks != None path (key-padding mask + masked
    # last-step selection) is not implemented; this is the default-None path.
    B, T, F = X.shape
    BB = _batch_block(B)
    GB = B // BB
    assert GB * BB == B
    BT = BB * T

    # circular Conv1d(k=3, padding=1, padding_mode='circular') taps as layout
    # glue, flattened batch-major so the kernel sees a (BT, 3F) slab per step.
    x_cat = jnp.concatenate(
        [jnp.roll(X, 1, axis=1), X, jnp.roll(X, -1, axis=1)], axis=2)  # (B, T, 3F)
    x_cat2d = x_cat.reshape(B * T, 3 * F)

    slab, offs = _pack_params(params, BB)
    kernel = _make_kernel(BB, offs)

    out = pl.pallas_call(
        kernel,
        out_shape=jax.ShapeDtypeStruct((GB, BB, OUT_LANES), jnp.float32),
        grid=(GB,),
        in_specs=[
            pl.BlockSpec((BT, 3 * F), lambda g: (g, 0)),   # per-step input rows
            pl.BlockSpec(slab.shape, lambda g: (0, 0)),    # single parameter slab
        ],
        out_specs=pl.BlockSpec((1, BB, OUT_LANES), lambda g: (g, 0, 0)),
        compiler_params=pltpu.CompilerParams(
            dimension_semantics=(("parallel",) if GB > 1 else ("arbitrary",))),
    )(x_cat2d, slab)

    return out.reshape(B, OUT_LANES)[:, :N_OUTPUT]


# ----------------------------- parameter setup -------------------------------
def init_params(key):
    D, F, Hf, O, T = D_MODEL, N_FEATURES, N_HIDDEN, N_OUTPUT, SEQ_LEN
    keys = jax.random.split(key, 16)

    def nrm(k, shape, fan_in):
        return jax.random.normal(k, shape, jnp.float32) / math.sqrt(fan_in)

    p = {}
    # TokenEmbedding conv weight, stored as (tap*F, D): wc[k*F+f, d] = torch_w[d, f, k]
    p["wc"] = nrm(keys[0], (3 * F, D), 3 * F)
    # Fixed sinusoidal positional encoding pe[:T, :D]
    pos = jnp.arange(T, dtype=jnp.float32)[:, None]
    div = jnp.exp(jnp.arange(0, D, 2, dtype=jnp.float32) * (-math.log(10000.0) / D))
    pe = jnp.zeros((T, D), jnp.float32)
    pe = pe.at[:, 0::2].set(jnp.sin(pos * div))
    pe = pe.at[:, 1::2].set(jnp.cos(pos * div))
    p["pe"] = pe
    # MultiheadAttention (math orientation: y = x @ W + b)
    p["wq"] = nrm(keys[1], (D, D), D); p["bq"] = nrm(keys[2], (1, D), D)
    p["wk"] = nrm(keys[3], (D, D), D); p["bk"] = nrm(keys[4], (1, D), D)
    p["wv"] = nrm(keys[5], (D, D), D); p["bv"] = nrm(keys[6], (1, D), D)
    p["wo"] = nrm(keys[7], (D, D), D); p["bo"] = nrm(keys[8], (1, D), D)
    # LayerNorms
    p["ln1_w"] = jnp.ones((1, D), jnp.float32) + 0.01 * jax.random.normal(keys[9], (1, D))
    p["ln1_b"] = 0.01 * jax.random.normal(keys[10], (1, D), jnp.float32)
    p["ln2_w"] = jnp.ones((1, D), jnp.float32) + 0.01 * jax.random.normal(keys[11], (1, D))
    p["ln2_b"] = 0.01 * jax.random.normal(keys[12], (1, D), jnp.float32)
    # Feed-forward
    p["w1"] = nrm(keys[13], (D, Hf), D); p["b1"] = nrm(keys[14], (1, Hf), D)
    p["w2"] = nrm(keys[15], (Hf, D), Hf); p["b2"] = jnp.zeros((1, D), jnp.float32)
    # output_layer (bias=False)
    p["wout"] = nrm(jax.random.fold_in(key, 99), (D, O), D)
    return p


# ------------------------------ pure-JAX reference ---------------------------
def _reference(X, p):
    B, T, F = X.shape
    D, H, Dh = D_MODEL, N_HEADS, HEAD_DIM
    xc = jnp.concatenate([jnp.roll(X, 1, axis=1), X, jnp.roll(X, -1, axis=1)], axis=2)
    x = (xc.reshape(B * T, 3 * F) @ p["wc"]).reshape(B, T, D) + p["pe"][None]
    q = x @ p["wq"] + p["bq"]
    k = x @ p["wk"] + p["bk"]
    v = x @ p["wv"] + p["bv"]
    qh = q.reshape(B, T, H, Dh).transpose(0, 2, 1, 3)
    kh = k.reshape(B, T, H, Dh).transpose(0, 2, 1, 3)
    vh = v.reshape(B, T, H, Dh).transpose(0, 2, 1, 3)
    s = jnp.einsum("bhqd,bhkd->bhqk", qh, kh) / math.sqrt(Dh)
    a = jax.nn.softmax(s, axis=-1)
    o = jnp.einsum("bhqk,bhkd->bhqd", a, vh).transpose(0, 2, 1, 3).reshape(B, T, D)
    attn = o @ p["wo"] + p["bo"]

    def ln(z, w, b):
        mu = z.mean(-1, keepdims=True)
        var = ((z - mu) ** 2).mean(-1, keepdims=True)
        return (z - mu) / jnp.sqrt(var + LN_EPS) * w + b

    x = ln(x + attn, p["ln1_w"], p["ln1_b"])
    h = jax.nn.gelu(x @ p["w1"] + p["b1"], approximate=False)
    x = ln(x + (h @ p["w2"] + p["b2"]), p["ln2_w"], p["ln2_b"])
    y = jax.nn.gelu(x[:, -1], approximate=False)
    return y @ p["wout"]


if __name__ == "__main__":
    key = jax.random.PRNGKey(0)
    kx, kp = jax.random.split(key)
    X = jax.random.normal(kx, (BATCH, SEQ_LEN, N_FEATURES), jnp.float32)
    params = init_params(kp)

    out = ts_transformer_encoder(X, params)
    jax.block_until_ready(out)
    assert out.shape == (BATCH, N_OUTPUT)
    assert bool(jnp.all(jnp.isfinite(out)))

    # correctness vs pure-JAX reference (approx-reciprocal softmax denominator
    # introduces ~1e-3-level differences; tolerance covers it with margin)
    ref = _reference(X, params)
    err = float(jnp.max(jnp.abs(out - ref)))
    assert err < 2e-2, f"max abs error vs reference: {err}"
    print("KERNEL_OK")
</pallas_src>

<mosaic_0001>
module attributes {stable_mosaic.version = 11 : i64} {
  func.func @kernel(%arg0: i32, %arg1: memref<32x12xf32, #tpu.memory_space<vmem>>, %arg2: memref<560x128xf32, #tpu.memory_space<vmem>>, %arg3: memref<1x2x128xf32, #tpu.memory_space<vmem>>) attributes {dimension_semantics = [#tpu.dimension_semantics<arbitrary>], iteration_bounds = array<i64: 1>, scalar_prefetch = 0 : i64, scratch_operands = 0 : i64, tpu.core_type = #tpu.core_type<tc>, window_params = [{transform_indices = @transform_0, window_bounds = array<i64: 32, 12>}, {pipeline_mode = #tpu.pipeline_mode<synchronous>, transform_indices = @transform_1, window_bounds = array<i64: 560, 128>}, {transform_indices = @transform_2, window_bounds = array<i64: 1, 2, 128>}]} {
    %c0 = arith.constant 0 : index
    %c0_0 = arith.constant 0 : index
    %0 = vector.load %arg2[%c0, %c0_0] : memref<560x128xf32, #tpu.memory_space<vmem>>, vector<12x32xf32>
    %c16 = arith.constant 16 : index
    %c0_1 = arith.constant 0 : index
    %1 = vector.load %arg2[%c16, %c0_1] : memref<560x128xf32, #tpu.memory_space<vmem>>, vector<32x32xf32>
    %c0_2 = arith.constant 0 : index
    %c0_3 = arith.constant 0 : index
    %2 = vector.load %arg1[%c0_2, %c0_3] : memref<32x12xf32, #tpu.memory_space<vmem>>, vector<32x12xf32>
    %cst = arith.constant dense<0.000000e+00> : vector<32x32xf32>
    %3 = tpu.matmul %2, %0, %cst {dimension_numbers = #tpu.dot_dimension_numbers<[1], [0], [0], [1], [0, 0, 1, 1], [], []>} : vector<32x12xf32>, vector<12x32xf32>, vector<32x32xf32> -> vector<32x32xf32>
    %4 = arith.addf %3, %1 : vector<32x32xf32>
    %c48 = arith.constant 48 : index
    %c0_4 = arith.constant 0 : index
    %5 = vector.load %arg2[%c48, %c0_4] : memref<560x128xf32, #tpu.memory_space<vmem>>, vector<32x96xf32>
    %c80 = arith.constant 80 : index
    %c0_5 = arith.constant 0 : index
    %6 = vector.load %arg2[%c80, %c0_5] : memref<560x128xf32, #tpu.memory_space<vmem>>, vector<1x96xf32>
    %cst_6 = arith.constant dense<0.000000e+00> : vector<32x96xf32>
    %7 = tpu.matmul %4, %5, %cst_6 {dimension_numbers = #tpu.dot_dimension_numbers<[1], [0], [0], [1], [0, 0, 1, 1], [], []>} : vector<32x32xf32>, vector<32x96xf32>, vector<32x96xf32> -> vector<32x96xf32>
    %8 = vector.broadcast %6 : vector<1x96xf32> to vector<32x96xf32>
    %9 = arith.addf %7, %8 : vector<32x96xf32>
    %10 = vector.extract_strided_slice %9 {offsets = [0, 0], sizes = [32, 32], strides = [1, 1]} : vector<32x96xf32> to vector<32x32xf32>
    %11 = vector.extract_strided_slice %9 {offsets = [0, 32], sizes = [32, 32], strides = [1, 1]} : vector<32x96xf32> to vector<32x32xf32>
    %12 = vector.extract_strided_slice %9 {offsets = [0, 64], sizes = [32, 32], strides = [1, 1]} : vector<32x96xf32> to vector<32x32xf32>
    %c120 = arith.constant 120 : index
    %c0_7 = arith.constant 0 : index
    %13 = vector.load %arg2[%c120, %c0_7] : memref<560x128xf32, #tpu.memory_space<vmem>>, vector<128x32xf32>
    %14 = tpu.concatenate %11, %11, %11, %11 in 0 : vector<32x32xf32>, vector<32x32xf32>, vector<32x32xf32>, vector<32x32xf32> -> vector<128x32xf32>
    %15 = arith.mulf %14, %13 : vector<128x32xf32>
    %16 = tpu.concatenate %12, %12, %12, %12 in 0 : vector<32x32xf32>, vector<32x32xf32>, vector<32x32xf32>, vector<32x32xf32> -> vector<128x32xf32>
    %17 = arith.mulf %16, %13 : vector<128x32xf32>
    %cst_8 = arith.constant dense<0.000000e+00> : vector<32x128xf32>
    %18 = tpu.matmul %10, %15, %cst_8 {dimension_numbers = #tpu.dot_dimension_numbers<[1], [1], [0], [0], [0, 0, 1, 0], [], []>} : vector<32x32xf32>, vector<128x32xf32>, vector<32x128xf32> -> vector<32x128xf32>
    %c248 = arith.constant 248 : index
    %c0_9 = arith.constant 0 : index
    %19 = vector.load %arg2[%c248, %c0_9] : memref<560x128xf32, #tpu.memory_space<vmem>>, vector<32x128xf32>
    %20 = arith.addf %18, %19 : vector<32x128xf32>
    %cst_10 = arith.constant dense<0xFF800000> : vector<32xf32>
    %21 = vector.multi_reduction <maximumf>, %20, %cst_10 [1] : vector<32x128xf32> to vector<32xf32>
    %22 = vector.shape_cast %21 : vector<32xf32> to vector<32x1xf32>
    %23 = vector.broadcast %22 : vector<32x1xf32> to vector<32x128xf32>
    %24 = arith.subf %20, %23 : vector<32x128xf32>
    %25 = math.exp %24 : vector<32x128xf32>
    %c280 = arith.constant 280 : index
    %c0_11 = arith.constant 0 : index
    %26 = vector.load %arg2[%c280, %c0_11] : memref<560x128xf32, #tpu.memory_space<vmem>>, vector<128x128xf32>
    %cst_12 = arith.constant dense<0.000000e+00> : vector<32x128xf32>
    %27 = tpu.matmul %25, %26, %cst_12 {dimension_numbers = #tpu.dot_dimension_numbers<[1], [0], [0], [1], [0, 0, 1, 1], [], []>} : vector<32x128xf32>, vector<128x128xf32>, vector<32x128xf32> -> vector<32x128xf32>
    %28 = tpu.reciprocal %27 {approx = true} : vector<32x128xf32> -> vector<32x128xf32>
    %29 = arith.mulf %25, %28 : vector<32x128xf32>
    %cst_13 = arith.constant dense<0.000000e+00> : vector<32x32xf32>
    %30 = tpu.matmul %29, %17, %cst_13 {dimension_numbers = #tpu.dot_dimension_numbers<[1], [0], [0], [1], [0, 0, 1, 1], [], []>} : vector<32x128xf32>, vector<128x32xf32>, vector<32x32xf32> -> vector<32x32xf32>
    %c512 = arith.constant 512 : index
    %c0_14 = arith.constant 0 : index
    %31 = vector.load %arg2[%c512, %c0_14] : memref<560x128xf32, #tpu.memory_space<vmem>>, vector<6x32xf32>
    %c88 = arith.constant 88 : index
    %c0_15 = arith.constant 0 : index
    %32 = vector.load %arg2[%c88, %c0_15] : memref<560x128xf32, #tpu.memory_space<vmem>>, vector<32x32xf32>
    %cst_16 = arith.constant dense<0.000000e+00> : vector<32x32xf32>
    %33 = tpu.matmul %30, %32, %cst_16 {dimension_numbers = #tpu.dot_dimension_numbers<[1], [0], [0], [1], [0, 0, 1, 1], [], []>} : vector<32x32xf32>, vector<32x32xf32>, vector<32x32xf32> -> vector<32x32xf32>
    %34 = vector.extract_strided_slice %31 {offsets = [0, 0], sizes = [1, 32], strides = [1, 1]} : vector<6x32xf32> to vector<1x32xf32>
    %35 = vector.broadcast %34 : vector<1x32xf32> to vector<32x32xf32>
    %36 = arith.addf %33, %35 : vector<32x32xf32>
    %37 = arith.addf %4, %36 : vector<32x32xf32>
    %38 = vector.extract_strided_slice %31 {offsets = [1, 0], sizes = [1, 32], strides = [1, 1]} : vector<6x32xf32> to vector<1x32xf32>
    %39 = vector.extract_strided_slice %31 {offsets = [2, 0], sizes = [1, 32], strides = [1, 1]} : vector<6x32xf32> to vector<1x32xf32>
    %cst_17 = arith.constant dense<0.000000e+00> : vector<32xf32>
    %40 = vector.multi_reduction <add>, %37, %cst_17 [1] : vector<32x32xf32> to vector<32xf32>
    %41 = vector.shape_cast %40 : vector<32xf32> to vector<32x1xf32>
    %cst_18 = arith.constant 3.200000e+01 : f32
    %42 = vector.broadcast %cst_18 : f32 to vector<32x1xf32>
    %43 = arith.divf %41, %42 : vector<32x1xf32>
    %44 = vector.broadcast %43 : vector<32x1xf32> to vector<32x32xf32>
    %45 = arith.subf %37, %44 : vector<32x32xf32>
    %46 = arith.mulf %45, %45 : vector<32x32xf32>
    %cst_19 = arith.constant dense<0.000000e+00> : vector<32xf32>
    %47 = vector.multi_reduction <add>, %46, %cst_19 [1] : vector<32x32xf32> to vector<32xf32>
    %48 = vector.shape_cast %47 : vector<32xf32> to vector<32x1xf32>
    %cst_20 = arith.constant 3.200000e+01 : f32
    %49 = vector.broadcast %cst_20 : f32 to vector<32x1xf32>
    %50 = arith.divf %48, %49 : vector<32x1xf32>
    %51 = vector.broadcast %43 : vector<32x1xf32> to vector<32x32xf32>
    %52 = arith.subf %37, %51 : vector<32x32xf32>
    %cst_21 = arith.constant 9.99999974E-6 : f32
    %53 = vector.broadcast %cst_21 : f32 to vector<32x1xf32>
    %54 = arith.addf %50, %53 : vector<32x1xf32>
    %55 = math.rsqrt %54 : vector<32x1xf32>
    %56 = vector.broadcast %55 : vector<32x1xf32> to vector<32x32xf32>
    %57 = arith.mulf %52, %56 : vector<32x32xf32>
    %58 = vector.broadcast %38 : vector<1x32xf32> to vector<32x32xf32>
    %59 = arith.mulf %57, %58 : vector<32x32xf32>
    %60 = vector.broadcast %39 : vector<1x32xf32> to vector<32x32xf32>
    %61 = arith.addf %59, %60 : vector<32x32xf32>
    %c408 = arith.constant 408 : index
    %c0_22 = arith.constant 0 : index
    %62 = vector.load %arg2[%c408, %c0_22] : memref<560x128xf32, #tpu.memory_space<vmem>>, vector<32x64xf32>
    %c440 = arith.constant 440 : index
    %c0_23 = arith.constant 0 : index
    %63 = vector.load %arg2[%c440, %c0_23] : memref<560x128xf32, #tpu.memory_space<vmem>>, vector<1x64xf32>
    %cst_24 = arith.constant dense<0.000000e+00> : vector<32x64xf32>
    %64 = tpu.matmul %61, %62, %cst_24 {dimension_numbers = #tpu.dot_dimension_numbers<[1], [0], [0], [1], [0, 0, 1, 1], [], []>} : vector<32x32xf32>, vector<32x64xf32>, vector<32x64xf32> -> vector<32x64xf32>
    %65 = vector.broadcast %63 : vector<1x64xf32> to vector<32x64xf32>
    %66 = arith.addf %64, %65 : vector<32x64xf32>
    %cst_25 = arith.constant 5.000000e-01 : f32
    %67 = vector.broadcast %cst_25 : f32 to vector<32x64xf32>
    %68 = arith.mulf %67, %66 : vector<32x64xf32>
    %cst_26 = arith.constant 0.707106769 : f32
    %69 = vector.broadcast %cst_26 : f32 to vector<32x64xf32>
    %70 = arith.mulf %66, %69 : vector<32x64xf32>
    %71 = math.absf %70 : vector<32x64xf32>
    %cst_27 = arith.constant 0.327591091 : f32
    %72 = vector.broadcast %cst_27 : f32 to vector<32x64xf32>
    %73 = arith.mulf %72, %71 : vector<32x64xf32>
    %cst_28 = arith.constant 1.000000e+00 : f32
    %74 = vector.broadcast %cst_28 : f32 to vector<32x64xf32>
    %75 = arith.addf %74, %73 : vector<32x64xf32>
    %cst_29 = arith.constant 1.000000e+00 : f32
    %76 = vector.broadcast %cst_29 : f32 to vector<32x64xf32>
    %77 = arith.divf %76, %75 : vector<32x64xf32>
    %cst_30 = arith.constant 1.06140542 : f32
    %78 = vector.broadcast %cst_30 : f32 to vector<32x64xf32>
    %79 = arith.mulf %78, %77 : vector<32x64xf32>
    %cst_31 = arith.constant 1.45315206 : f32
    %80 = vector.broadcast %cst_31 : f32 to vector<32x64xf32>
    %81 = arith.subf %79, %80 : vector<32x64xf32>
    %82 = arith.mulf %81, %77 : vector<32x64xf32>
    %cst_32 = arith.constant 1.42141378 : f32
    %83 = vector.broadcast %cst_32 : f32 to vector<32x64xf32>
    %84 = arith.addf %82, %83 : vector<32x64xf32>
    %85 = arith.mulf %84, %77 : vector<32x64xf32>
    %cst_33 = arith.constant 0.284496725 : f32
    %86 = vector.broadcast %cst_33 : f32 to vector<32x64xf32>
    %87 = arith.subf %85, %86 : vector<32x64xf32>
    %88 = arith.mulf %87, %77 : vector<32x64xf32>
    %cst_34 = arith.constant 0.254829586 : f32
    %89 = vector.broadcast %cst_34 : f32 to vector<32x64xf32>
    %90 = arith.addf %88, %89 : vector<32x64xf32>
    %91 = arith.mulf %90, %77 : vector<32x64xf32>
    %cst_35 = arith.constant 0.000000e+00 : f32
    %92 = vector.broadcast %cst_35 : f32 to vector<32x64xf32>
    %93 = arith.subf %92, %71 : vector<32x64xf32>
    %94 = arith.mulf %93, %71 : vector<32x64xf32>
    %95 = math.exp %94 : vector<32x64xf32>
    %96 = arith.mulf %91, %95 : vector<32x64xf32>
    %cst_36 = arith.constant 1.000000e+00 : f32
    %97 = vector.broadcast %cst_36 : f32 to vector<32x64xf32>
    %98 = arith.subf %97, %96 : vector<32x64xf32>
    %cst_37 = arith.constant 0.000000e+00 : f32
    %99 = vector.broadcast %cst_37 : f32 to vector<32x64xf32>
    %100 = arith.cmpf olt, %70, %99 : vector<32x64xf32>
    %cst_38 = arith.constant 0.000000e+00 : f32
    %101 = vector.broadcast %cst_38 : f32 to vector<32x64xf32>
    %102 = arith.subf %101, %98 : vector<32x64xf32>
    %103 = arith.select %100, %102, %98 : vector<32x64xi1>, vector<32x64xf32>
    %cst_39 = arith.constant 1.000000e+00 : f32
    %104 = vector.broadcast %cst_39 : f32 to vector<32x64xf32>
    %105 = arith.addf %104, %103 : vector<32x64xf32>
    %106 = arith.mulf %68, %105 : vector<32x64xf32>
    %c448 = arith.constant 448 : index
    %c0_40 = arith.constant 0 : index
    %107 = vector.load %arg2[%c448, %c0_40] : memref<560x128xf32, #tpu.memory_space<vmem>>, vector<64x32xf32>
    %cst_41 = arith.constant dense<0.000000e+00> : vector<32x32xf32>
    %108 = tpu.matmul %106, %107, %cst_41 {dimension_numbers = #tpu.dot_dimension_numbers<[1], [0], [0], [1], [0, 0, 1, 1], [], []>} : vector<32x64xf32>, vector<64x32xf32>, vector<32x32xf32> -> vector<32x32xf32>
    %109 = vector.extract_strided_slice %31 {offsets = [3, 0], sizes = [1, 32], strides = [1, 1]} : vector<6x32xf32> to vector<1x32xf32>
    %110 = vector.broadcast %109 : vector<1x32xf32> to vector<32x32xf32>
    %111 = arith.addf %108, %110 : vector<32x32xf32>
    %112 = arith.addf %61, %111 : vector<32x32xf32>
    %113 = vector.extract_strided_slice %31 {offsets = [4, 0], sizes = [1, 32], strides = [1, 1]} : vector<6x32xf32> to vector<1x32xf32>
    %114 = vector.extract_strided_slice %31 {offsets = [5, 0], sizes = [1, 32], strides = [1, 1]} : vector<6x32xf32> to vector<1x32xf32>
    %cst_42 = arith.constant dense<0.000000e+00> : vector<32xf32>
    %115 = vector.multi_reduction <add>, %112, %cst_42 [1] : vector<32x32xf32> to vector<32xf32>
    %116 = vector.shape_cast %115 : vector<32xf32> to vector<32x1xf32>
    %cst_43 = arith.constant 3.200000e+01 : f32
    %117 = vector.broadcast %cst_43 : f32 to vector<32x1xf32>
    %118 = arith.divf %116, %117 : vector<32x1xf32>
    %119 = vector.broadcast %118 : vector<32x1xf32> to vector<32x32xf32>
    %120 = arith.subf %112, %119 : vector<32x32xf32>
    %121 = arith.mulf %120, %120 : vector<32x32xf32>
    %cst_44 = arith.constant dense<0.000000e+00> : vector<32xf32>
    %122 = vector.multi_reduction <add>, %121, %cst_44 [1] : vector<32x32xf32> to vector<32xf32>
    %123 = vector.shape_cast %122 : vector<32xf32> to vector<32x1xf32>
    %cst_45 = arith.constant 3.200000e+01 : f32
    %124 = vector.broadcast %cst_45 : f32 to vector<32x1xf32>
    %125 = arith.divf %123, %124 : vector<32x1xf32>
    %126 = vector.broadcast %118 : vector<32x1xf32> to vector<32x32xf32>
    %127 = arith.subf %112, %126 : vector<32x32xf32>
    %cst_46 = arith.constant 9.99999974E-6 : f32
    %128 = vector.broadcast %cst_46 : f32 to vector<32x1xf32>
    %129 = arith.addf %125, %128 : vector<32x1xf32>
    %130 = math.rsqrt %129 : vector<32x1xf32>
    %131 = vector.broadcast %130 : vector<32x1xf32> to vector<32x32xf32>
    %132 = arith.mulf %127, %131 : vector<32x32xf32>
    %133 = vector.broadcast %113 : vector<1x32xf32> to vector<32x32xf32>
    %134 = arith.mulf %132, %133 : vector<32x32xf32>
    %135 = vector.broadcast %114 : vector<1x32xf32> to vector<32x32xf32>
    %136 = arith.addf %134, %135 : vector<32x32xf32>
    %c520 = arith.constant 520 : index
    %c0_47 = arith.constant 0 : index
    %137 = vector.load %arg2[%c520, %c0_47] : memref<560x128xf32, #tpu.memory_space<vmem>>, vector<2x32xf32>
    %cst_48 = arith.constant dense<0.000000e+00> : vector<2x32xf32>
    %138 = tpu.matmul %137, %136, %cst_48 {dimension_numbers = #tpu.dot_dimension_numbers<[1], [0], [0], [1], [0, 0, 1, 1], [], []>} : vector<2x32xf32>, vector<32x32xf32>, vector<2x32xf32> -> vector<2x32xf32>
    %cst_49 = arith.constant 5.000000e-01 : f32
    %139 = vector.broadcast %cst_49 : f32 to vector<2x32xf32>
    %140 = arith.mulf %139, %138 : vector<2x32xf32>
    %cst_50 = arith.constant 0.707106769 : f32
    %141 = vector.broadcast %cst_50 : f32 to vector<2x32xf32>
    %142 = arith.mulf %138, %141 : vector<2x32xf32>
    %143 = math.absf %142 : vector<2x32xf32>
    %cst_51 = arith.constant 0.327591091 : f32
    %144 = vector.broadcast %cst_51 : f32 to vector<2x32xf32>
    %145 = arith.mulf %144, %143 : vector<2x32xf32>
    %cst_52 = arith.constant 1.000000e+00 : f32
    %146 = vector.broadcast %cst_52 : f32 to vector<2x32xf32>
    %147 = arith.addf %146, %145 : vector<2x32xf32>
    %cst_53 = arith.constant 1.000000e+00 : f32
    %148 = vector.broadcast %cst_53 : f32 to vector<2x32xf32>
    %149 = arith.divf %148, %147 : vector<2x32xf32>
    %cst_54 = arith.constant 1.06140542 : f32
    %150 = vector.broadcast %cst_54 : f32 to vector<2x32xf32>
    %151 = arith.mulf %150, %149 : vector<2x32xf32>
    %cst_55 = arith.constant 1.45315206 : f32
    %152 = vector.broadcast %cst_55 : f32 to vector<2x32xf32>
    %153 = arith.subf %151, %152 : vector<2x32xf32>
    %154 = arith.mulf %153, %149 : vector<2x32xf32>
    %cst_56 = arith.constant 1.42141378 : f32
    %155 = vector.broadcast %cst_56 : f32 to vector<2x32xf32>
    %156 = arith.addf %154, %155 : vector<2x32xf32>
    %157 = arith.mulf %156, %149 : vector<2x32xf32>
    %cst_57 = arith.constant 0.284496725 : f32
    %158 = vector.broadcast %cst_57 : f32 to vector<2x32xf32>
    %159 = arith.subf %157, %158 : vector<2x32xf32>
    %160 = arith.mulf %159, %149 : vector<2x32xf32>
    %cst_58 = arith.constant 0.254829586 : f32
    %161 = vector.broadcast %cst_58 : f32 to vector<2x32xf32>
    %162 = arith.addf %160, %161 : vector<2x32xf32>
    %163 = arith.mulf %162, %149 : vector<2x32xf32>
    %cst_59 = arith.constant 0.000000e+00 : f32
    %164 = vector.broadcast %cst_59 : f32 to vector<2x32xf32>
    %165 = arith.subf %164, %143 : vector<2x32xf32>
    %166 = arith.mulf %165, %143 : vector<2x32xf32>
    %167 = math.exp %166 : vector<2x32xf32>
    %168 = arith.mulf %163, %167 : vector<2x32xf32>
    %cst_60 = arith.constant 1.000000e+00 : f32
    %169 = vector.broadcast %cst_60 : f32 to vector<2x32xf32>
    %170 = arith.subf %169, %168 : vector<2x32xf32>
    %cst_61 = arith.constant 0.000000e+00 : f32
    %171 = vector.broadcast %cst_61 : f32 to vector<2x32xf32>
    %172 = arith.cmpf olt, %142, %171 : vector<2x32xf32>
    %cst_62 = arith.constant 0.000000e+00 : f32
    %173 = vector.broadcast %cst_62 : f32 to vector<2x32xf32>
    %174 = arith.subf %173, %170 : vector<2x32xf32>
    %175 = arith.select %172, %174, %170 : vector<2x32xi1>, vector<2x32xf32>
    %cst_63 = arith.constant 1.000000e+00 : f32
    %176 = vector.broadcast %cst_63 : f32 to vector<2x32xf32>
    %177 = arith.addf %176, %175 : vector<2x32xf32>
    %178 = arith.mulf %140, %177 : vector<2x32xf32>
    %c528 = arith.constant 528 : index
    %c0_64 = arith.constant 0 : index
    %179 = vector.load %arg2[%c528, %c0_64] : memref<560x128xf32, #tpu.memory_space<vmem>>, vector<32x128xf32>
    %cst_65 = arith.constant dense<0.000000e+00> : vector<2x128xf32>
    %180 = tpu.matmul %178, %179, %cst_65 {dimension_numbers = #tpu.dot_dimension_numbers<[1], [0], [0], [1], [0, 0, 1, 1], [], []>} : vector<2x32xf32>, vector<32x128xf32>, vector<2x128xf32> -> vector<2x128xf32>
    %c0_66 = arith.constant 0 : index
    %c0_67 = arith.constant 0 : index
    %c0_68 = arith.constant 0 : index
    %181 = vector.load %arg3[%c0_66, %c0_67, %c0_68] : memref<1x2x128xf32, #tpu.memory_space<vmem>>, vector<1x2x128xf32>
    %182 = vector.shape_cast %181 : vector<1x2x128xf32> to vector<2x128xf32>
    %183 = vector.shape_cast %180 : vector<2x128xf32> to vector<1x2x128xf32>
    tpu.vector_store %arg3[%c0_66, %c0_67, %c0_68], %183 {strides = array<i32>} : memref<1x2x128xf32, #tpu.memory_space<vmem>>, vector<1x2x128xf32>,
    return
  }
  func.func @transform_0(%arg0: i32) -> (i32, i32) {
    %c0_i32 = arith.constant 0 : i32
    %c0_i32_0 = arith.constant 0 : i32
    return %arg0, %c0_i32 : i32, i32
  }
  func.func @transform_1(%arg0: i32) -> (i32, i32) {
    %c0_i32 = arith.constant 0 : i32
    %c0_i32_0 = arith.constant 0 : i32
    %c0_i32_1 = arith.constant 0 : i32
    return %c0_i32, %c0_i32_0 : i32, i32
  }
  func.func @transform_2(%arg0: i32) -> (i32, i32, i32) {
    %c0_i32 = arith.constant 0 : i32
    %c0_i32_0 = arith.constant 0 : i32
    %c0_i32_1 = arith.constant 0 : i32
    return %arg0, %c0_i32, %c0_i32_0 : i32, i32, i32
  }
}

</mosaic_0001>

<llo_original>
// kernel: tpu_custom_call.1
$region0: #{tpu_custom_call.1}
  #allocation0 [shape = 'u32[]', space=smem, size = 0x4, offset = 0x4, fixed_abs, tag = 'smem constant byte address 0x4 - core index']
  #allocation1 [shape = 'u32[72,128]{1,0:T(1,128)}', space=vmem, size = 0x9000, scoped, tag = 'internal scratch']
  %s0 = inlined_call_operand.vmem [shape: f32[32,12], index: 0, kind: input, shape index: {}]
  %s1 = inlined_call_operand.hbm [shape: f32[560,128], index: 1, kind: input, shape index: {}]
  %s2 = inlined_call_operand.hbm [shape: f32[1,2,128], index: 2, kind: output, shape index: {}]
  %s3 = sld [smem:[#allocation0]]
  $region22: #{tpu_custom_call.1} parent=0
    _
  %s5 = ssub.s32 1, %s3
  %s6 = scalar_select 0, %s5, %s3
  $region1: #{tpu_custom_call.1} parent=0
    #allocation2 [shape = 'u8[286720]{0}', space=vmem, size = 0x46000, scoped, tag = 'input window, operand 1, single buffered']
    #allocation3 [shape = 's32[1]{0}', space=sflag, size = 0x4, scoped, tag = 'scoped memory for tpu_custom_call.1']
    #allocation4 [shape = 's32[1]{0}', space=sflag, size = 0x4, scoped, tag = 'scoped memory for tpu_custom_call.1']
    #allocation5 [shape = 'u8[1024]{0}', space=vmem, size = 0x400, scoped, tag = 'output window, operand 0, single buffered']
    %7 = vsyncpa [#allocation3], 0
    %8 = vsyncpa [#allocation4], 0
    // Predicated region
    $region2: #{tpu_custom_call.1} parent=1 // pred_check
      _
    $region3: #{tpu_custom_call.1} parent=1 // pred_check_branch
      %10 = sbr.rel (0) target = $region5
    $region4: #{tpu_custom_call.1} parent=1 // pred_region
      _
    $region5: #{tpu_custom_call.1} parent=1 // pred_fallthru
      _
    // Predicated region
    $region6: #{tpu_custom_call.1} parent=1 // pred_check
      _
    $region7: #{tpu_custom_call.1} parent=1 // pred_check_branch
      %12 = sbr.rel (0) target = $region9
    $region8: #{tpu_custom_call.1} parent=1 // pred_region
      %14 = vsyncadd [#allocation3], 0
      %s15 = sshll.u32 %s1, 4
      %s16 = int_to_ptr.hbm [resolvable:$true] %s15
      %s17 = sshll.u32 [#allocation2], 4
      %s18 = int_to_ptr.vmem [resolvable:$true] %s17
      %23 = dma.hbm_to_vmem [thread:$0]  %s16, 8960, %s18, [#allocation3], 128, 128, 8
    $region9: #{tpu_custom_call.1} parent=1 // pred_fallthru
      _
    // Predicated region
    $region10: #{tpu_custom_call.1} parent=1 // pred_check
      _
    $region11: #{tpu_custom_call.1} parent=1 // pred_check_branch
      %25 = sbr.rel (0) target = $region13
    $region12: #{tpu_custom_call.1} parent=1 // pred_region
      %27 = dma.done [#allocation3], 8960
    $region13: #{tpu_custom_call.1} parent=1 // pred_fallthru
      _
    %v28 = vld [vmem:[#allocation2] sm:$0xff]
    %v29 = vld [vmem:[#allocation2 + $0x8] sm:$0xf]
    %v30 = vld [vmem:[#allocation2 + $0x10] sm:$0xff]
    %v31 = vld [vmem:[#allocation2 + $0x18] sm:$0xff]
    %v32 = vld [vmem:[#allocation2 + $0x20] sm:$0xff]
    %v33 = vld [vmem:[#allocation2 + $0x28] sm:$0xff]
    %v34 = vld [vmem:[%s0] sm:$0xff]
    %v35 = vld [vmem:[%s0 + $0x8] sm:$0xff]
    %v36 = vld [vmem:[%s0 + $0x10] sm:$0xff]
    %v37 = vld [vmem:[%s0 + $0x18] sm:$0xff]
    %vm38 = vcmask 97280
    %v40 = vsel %vm38, %v34, 0
    %v43 = vsel %vm38, %v35, 0
    %v46 = vsel %vm38, %v36, 0
    %v49 = vsel %vm38, %v37, 0
    %vm51 = vcmask 1043456
    %v53 = vsel %vm51, %v29, 0
    %55 = vmatpush.msra.mxu0 0.0
    %56 = vmatpush.msra.mxu0 0.0
    %57 = vmatpush.msra.mxu0 0.0
    %58 = vmatpush.msra.mxu0 0.0
    %59 = vmatpush.msra.mxu0 0.0
    %60 = vmatpush.msra.mxu0 0.0
    %61 = vmatpush.msra.mxu0 0.0
    %62 = vmatpush.msra.mxu0 0.0
    %63 = vmatpush.msra.mxu0 0.0
    %64 = vmatpush.msra.mxu0 0.0
    %65 = vmatpush.msra.mxu0 0.0
    %66 = vmatpush.msra.mxu0 0.0
    %67 = vmatpush.msra.mxu0 0.0
    %68 = vmatpush.msra.mxu0 0.0
    %69 = vmatpush.msra.mxu0 %v53
    %70 = vmatpush.msra.mxu0 %v28
    %71 = vmatmul.f32.gmra.mxu0 %v40
    %v72 = vpop.f32.mrf.mxu0
    %v73 = vadd.f32 %v30, %v72
    %74 = vmatmul.f32.gmra.mxu0 %v43
    %v75 = vpop.f32.mrf.mxu0
    %v76 = vadd.f32 %v31, %v75
    %77 = vmatmul.f32.gmra.mxu0 %v46
    %v78 = vpop.f32.mrf.mxu0
    %v79 = vadd.f32 %v32, %v78
    %80 = vmatmul.f32.gmra.mxu0 %v49
    %v81 = vpop.f32.mrf.mxu0
    %v82 = vadd.f32 %v33, %v81
    %83 = vdwg.mxu0
    %v84 = vld [vmem:[#allocation2 + $0x30] sm:$0xff]
    %v85 = vld [vmem:[#allocation2 + $0x38] sm:$0xff]
    %v86 = vld [vmem:[#allocation2 + $0x40] sm:$0xff]
    %v87 = vld [vmem:[#allocation2 + $0x48] sm:$0xff]
    %v88 = vld [vmem:[#allocation2 + $0x50] sm:$0x1]
    %v89 = vperm.slane %v88, 0
    %vm90 = vcmask 261120
    %v92 = vsel %vm90, %v73, 0
    %v95 = vsel %vm90, %v76, 0
    %v98 = vsel %vm90, %v79, 0
    %v101 = vsel %vm90, %v82, 0
    %103 = vmatpush.msra.mxu0 0.0
    %104 = vmatpush.msra.mxu0 0.0
    %105 = vmatpush.msra.mxu0 0.0
    %106 = vmatpush.msra.mxu0 0.0
    %107 = vmatpush.msra.mxu0 0.0
    %108 = vmatpush.msra.mxu0 0.0
    %109 = vmatpush.msra.mxu0 0.0
    %110 = vmatpush.msra.mxu0 0.0
    %111 = vmatpush.msra.mxu0 0.0
    %112 = vmatpush.msra.mxu0 0.0
    %113 = vmatpush.msra.mxu0 0.0
    %114 = vmatpush.msra.mxu0 0.0
    %115 = vmatpush.msra.mxu0 %v87
    %116 = vmatpush.msra.mxu0 %v86
    %117 = vmatpush.msra.mxu0 %v85
    %118 = vmatpush.msra.mxu0 %v84
    %119 = vmatmul.f32.gmra.mxu0 %v92
    %v120 = vpop.f32.mrf.mxu0
    %v121 = vadd.f32 %v89, %v120
    %122 = vmatmul.f32.gmra.mxu0 %v95
    %v123 = vpop.f32.mrf.mxu0
    %v124 = vadd.f32 %v89, %v123
    %125 = vmatmul.f32.gmra.mxu0 %v98
    %v126 = vpop.f32.mrf.mxu0
    %v127 = vadd.f32 %v89, %v126
    %128 = vmatmul.f32.gmra.mxu0 %v101
    %v129 = vpop.f32.mrf.mxu0
    %v130 = vadd.f32 %v89, %v129
    %131 = vdwg.mxu0
    %v132 = vld [vmem:[#allocation2 + $0x78] sm:$0xff]
    %v133 = vld [vmem:[#allocation2 + $0x80] sm:$0xff]
    %v134 = vld [vmem:[#allocation2 + $0x88] sm:$0xff]
    %v135 = vld [vmem:[#allocation2 + $0x90] sm:$0xff]
    %v136 = vld [vmem:[#allocation2 + $0x98] sm:$0xff]
    %v137 = vld [vmem:[#allocation2 + $0xa0] sm:$0xff]
    %v138 = vld [vmem:[#allocation2 + $0xa8] sm:$0xff]
    %v139 = vld [vmem:[#allocation2 + $0xb0] sm:$0xff]
    %v140 = vld [vmem:[#allocation2 + $0xb8] sm:$0xff]
    %v141 = vld [vmem:[#allocation2 + $0xc0] sm:$0xff]
    %v142 = vld [vmem:[#allocation2 + $0xc8] sm:$0xff]
    %v143 = vld [vmem:[#allocation2 + $0xd0] sm:$0xff]
    %v144 = vld [vmem:[#allocation2 + $0xd8] sm:$0xff]
    %v145 = vld [vmem:[#allocation2 + $0xe0] sm:$0xff]
    %v146 = vld [vmem:[#allocation2 + $0xe8] sm:$0xff]
    %v147 = vld [vmem:[#allocation2 + $0xf0] sm:$0xff]
    %164 = vrot.lane.b32.xlu0 %v132, 32
    %v165 = vpop.permute.xlu0 %164
    %166 = vrot.lane.b32.xlu0 %v133, 32
    %v167 = vpop.permute.xlu0 %166
    %168 = vrot.lane.b32.xlu0 %v134, 32
    %v169 = vpop.permute.xlu0 %168
    %170 = vrot.lane.b32.xlu0 %v135, 32
    %v171 = vpop.permute.xlu0 %170
    %172 = vrot.lane.b32.xlu0 %v136, 32
    %v173 = vpop.permute.xlu0 %172
    %174 = vrot.lane.b32.xlu0 %v137, 32
    %v175 = vpop.permute.xlu0 %174
    %176 = vrot.lane.b32.xlu0 %v138, 32
    %v177 = vpop.permute.xlu0 %176
    %178 = vrot.lane.b32.xlu0 %v139, 32
    %v179 = vpop.permute.xlu0 %178
    %180 = vrot.lane.b32.xlu0 %v140, 32
    %v181 = vpop.permute.xlu0 %180
    %182 = vrot.lane.b32.xlu0 %v141, 32
    %v183 = vpop.permute.xlu0 %182
    %184 = vrot.lane.b32.xlu0 %v142, 32
    %v185 = vpop.permute.xlu0 %184
    %186 = vrot.lane.b32.xlu0 %v143, 32
    %v187 = vpop.permute.xlu0 %186
    %188 = vrot.lane.b32.xlu0 %v144, 32
    %v189 = vpop.permute.xlu0 %188
    %190 = vrot.lane.b32.xlu0 %v145, 32
    %v191 = vpop.permute.xlu0 %190
    %192 = vrot.lane.b32.xlu0 %v146, 32
    %v193 = vpop.permute.xlu0 %192
    %194 = vrot.lane.b32.xlu0 %v147, 32
    %v195 = vpop.permute.xlu0 %194
    %v212 = vmul.f32 %v121, %v165
    %v213 = vmul.f32 %v124, %v167
    %v214 = vmul.f32 %v127, %v169
    %v215 = vmul.f32 %v130, %v171
    %v216 = vmul.f32 %v121, %v173
    %v217 = vmul.f32 %v124, %v175
    %v218 = vmul.f32 %v127, %v177
    %v219 = vmul.f32 %v130, %v179
    %v220 = vmul.f32 %v121, %v181
    %v221 = vmul.f32 %v124, %v183
    %v222 = vmul.f32 %v127, %v185
    %v223 = vmul.f32 %v130, %v187
    %v224 = vmul.f32 %v121, %v189
    %v225 = vmul.f32 %v124, %v191
    %v226 = vmul.f32 %v127, %v193
    %v227 = vmul.f32 %v130, %v195
    %228 = vrot.lane.b32.xlu0 %v132, 64
    %v229 = vpop.permute.xlu0 %228
    %230 = vrot.lane.b32.xlu0 %v133, 64
    %v231 = vpop.permute.xlu0 %230
    %232 = vrot.lane.b32.xlu0 %v134, 64
    %v233 = vpop.permute.xlu0 %232
    %234 = vrot.lane.b32.xlu0 %v135, 64
    %v235 = vpop.permute.xlu0 %234
    %236 = vrot.lane.b32.xlu0 %v136, 64
    %v237 = vpop.permute.xlu0 %236
    %238 = vrot.lane.b32.xlu0 %v137, 64
    %v239 = vpop.permute.xlu0 %238
    %240 = vrot.lane.b32.xlu0 %v138, 64
    %v241 = vpop.permute.xlu0 %240
    %242 = vrot.lane.b32.xlu0 %v139, 64
    %v243 = vpop.permute.xlu0 %242
    %244 = vrot.lane.b32.xlu0 %v140, 64
    %v245 = vpop.permute.xlu0 %244
    %246 = vrot.lane.b32.xlu0 %v141, 64
    %v247 = vpop.permute.xlu0 %246
    %248 = vrot.lane.b32.xlu0 %v142, 64
    %v249 = vpop.permute.xlu0 %248
    %250 = vrot.lane.b32.xlu0 %v143, 64
    %v251 = vpop.permute.xlu0 %250
    %252 = vrot.lane.b32.xlu0 %v144, 64
    %v253 = vpop.permute.xlu0 %252
    %254 = vrot.lane.b32.xlu0 %v145, 64
    %v255 = vpop.permute.xlu0 %254
    %256 = vrot.lane.b32.xlu0 %v146, 64
    %v257 = vpop.permute.xlu0 %256
    %258 = vrot.lane.b32.xlu0 %v147, 64
    %v259 = vpop.permute.xlu0 %258
    %v276 = vmul.f32 %v121, %v229
    %v277 = vmul.f32 %v124, %v231
    %v278 = vmul.f32 %v127, %v233
    %v279 = vmul.f32 %v130, %v235
    %v280 = vmul.f32 %v121, %v237
    %v281 = vmul.f32 %v124, %v239
    %v282 = vmul.f32 %v127, %v241
    %v283 = vmul.f32 %v130, %v243
    %v284 = vmul.f32 %v121, %v245
    %v285 = vmul.f32 %v124, %v247
    %v286 = vmul.f32 %v127, %v249
    %v287 = vmul.f32 %v130, %v251
    %v288 = vmul.f32 %v121, %v253
    %v289 = vmul.f32 %v124, %v255
    %v290 = vmul.f32 %v127, %v257
    %v291 = vmul.f32 %v130, %v259
    %v292 = vld [vmem:[#allocation2 + $0xf8] sm:$0xff]
    %v293 = vld [vmem:[#allocation2 + $0x100] sm:$0xff]
    %v294 = vld [vmem:[#allocation2 + $0x108] sm:$0xff]
    %v295 = vld [vmem:[#allocation2 + $0x110] sm:$0xff]
    %312 = vrot.lane.b32.xlu0 %v212, 96
    %v313 = vpop.permute.xlu0 %312
    %314 = vrot.lane.b32.xlu0 %v213, 96
    %v315 = vpop.permute.xlu0 %314
    %316 = vrot.lane.b32.xlu0 %v214, 96
    %v317 = vpop.permute.xlu0 %316
    %318 = vrot.lane.b32.xlu0 %v215, 96
    %v319 = vpop.permute.xlu0 %318
    %320 = vrot.lane.b32.xlu0 %v216, 96
    %v321 = vpop.permute.xlu0 %320
    %322 = vrot.lane.b32.xlu0 %v217, 96
    %v323 = vpop.permute.xlu0 %322
    %324 = vrot.lane.b32.xlu0 %v218, 96
    %v325 = vpop.permute.xlu0 %324
    %326 = vrot.lane.b32.xlu0 %v219, 96
    %v327 = vpop.permute.xlu0 %326
    %328 = vrot.lane.b32.xlu0 %v220, 96
    %v329 = vpop.permute.xlu0 %328
    %330 = vrot.lane.b32.xlu0 %v221, 96
    %v331 = vpop.permute.xlu0 %330
    %332 = vrot.lane.b32.xlu0 %v222, 96
    %v333 = vpop.permute.xlu0 %332
    %334 = vrot.lane.b32.xlu0 %v223, 96
    %v335 = vpop.permute.xlu0 %334
    %336 = vrot.lane.b32.xlu0 %v224, 96
    %v337 = vpop.permute.xlu0 %336
    %338 = vrot.lane.b32.xlu0 %v225, 96
    %v339 = vpop.permute.xlu0 %338
    %340 = vrot.lane.b32.xlu0 %v226, 96
    %v341 = vpop.permute.xlu0 %340
    %342 = vrot.lane.b32.xlu0 %v227, 96
    %v343 = vpop.permute.xlu0 %342
    %v345 = vsel %vm90, %v121, 0
    %v348 = vsel %vm90, %v124, 0
    %v351 = vsel %vm90, %v127, 0
    %v354 = vsel %vm90, %v130, 0
    %v356 = vsel %vm90, %v313, 0
    %v358 = vsel %vm90, %v315, 0
    %v360 = vsel %vm90, %v317, 0
    %v362 = vsel %vm90, %v319, 0
    %v364 = vsel %vm90, %v321, 0
    %v366 = vsel %vm90, %v323, 0
    %v368 = vsel %vm90, %v325, 0
    %v370 = vsel %vm90, %v327, 0
    %v372 = vsel %vm90, %v329, 0
    %v374 = vsel %vm90, %v331, 0
    %v376 = vsel %vm90, %v333, 0
    %v378 = vsel %vm90, %v335, 0
    %v380 = vsel %vm90, %v337, 0
    %v382 = vsel %vm90, %v339, 0
    %v384 = vsel %vm90, %v341, 0
    %v386 = vsel %vm90, %v343, 0
    %388 = vmatpush.xpose.msra.mxu0 %v386
    %389 = vmatpush.xpose.msra.mxu0 %v384
    %390 = vmatpush.xpose.msra.mxu0 %v382
    %391 = vmatpush.xpose.msra.mxu0 %v380
    %392 = vmatpush.xpose.msra.mxu0 %v378
    %393 = vmatpush.xpose.msra.mxu0 %v376
    %394 = vmatpush.xpose.msra.mxu0 %v374
    %395 = vmatpush.xpose.msra.mxu0 %v372
    %396 = vmatpush.xpose.msra.mxu0 %v370
    %397 = vmatpush.xpose.msra.mxu0 %v368
    %398 = vmatpush.xpose.msra.mxu0 %v366
    %399 = vmatpush.xpose.msra.mxu0 %v364
    %400 = vmatpush.xpose.msra.mxu0 %v362
    %401 = vmatpush.xpose.msra.mxu0 %v360
    %402 = vmatpush.xpose.msra.mxu0 %v358
    %403 = vmatpush.xpose.msra.mxu0 %v356
    %404 = vmatmul.f32.gmra.mxu0 %v345
    %v405 = vpop.f32.mrf.mxu0
    %v406 = vadd.f32 %v292, %v405
    %407 = vmatmul.f32.gmra.mxu0 %v348
    %v408 = vpop.f32.mrf.mxu0
    %v409 = vadd.f32 %v293, %v408
    %410 = vmatmul.f32.gmra.mxu0 %v351
    %v411 = vpop.f32.mrf.mxu0
    %v412 = vadd.f32 %v294, %v411
    %413 = vmatmul.f32.gmra.mxu0 %v354
    %v414 = vpop.f32.mrf.mxu0
    %v415 = vadd.f32 %v295, %v414
    %416 = vdwg.mxu0
    %417 = vmax.xlane.f32.xlu0 %v406
    %v418 = vpop.xlane.xlu0 %417
    %419 = vmax.xlane.f32.xlu0 %v409
    %v420 = vpop.xlane.xlu0 %419
    %421 = vmax.xlane.f32.xlu0 %v412
    %v422 = vpop.xlane.xlu0 %421
    %423 = vmax.xlane.f32.xlu0 %v415
    %v424 = vpop.xlane.xlu0 %423
    %v425 = vsub.f32 %v406, %v418
    %v426 = vsub.f32 %v409, %v420
    %v427 = vsub.f32 %v412, %v422
    %v428 = vsub.f32 %v415, %v424
    %v429 = vmul.f32 %v425, 1.442695
    %v430 = vpow.pop %v429
    %v431 = vmul.f32 %v426, 1.442695
    %v432 = vpow.pop %v431
    %v433 = vmul.f32 %v427, 1.442695
    %v434 = vpow.pop %v433
    %v435 = vmul.f32 %v428, 1.442695
    %v436 = vpow.pop %v435
    %v437 = vld [vmem:[#allocation2 + $0x118] sm:$0xff]
    %v438 = vld [vmem:[#allocation2 + $0x120] sm:$0xff]
    %v439 = vld [vmem:[#allocation2 + $0x128] sm:$0xff]
    %v440 = vld [vmem:[#allocation2 + $0x130] sm:$0xff]
    %v441 = vld [vmem:[#allocation2 + $0x138] sm:$0xff]
    %v442 = vld [vmem:[#allocation2 + $0x140] sm:$0xff]
    %v443 = vld [vmem:[#allocation2 + $0x148] sm:$0xff]
    %v444 = vld [vmem:[#allocation2 + $0x150] sm:$0xff]
    %v445 = vld [vmem:[#allocation2 + $0x158] sm:$0xff]
    %v446 = vld [vmem:[#allocation2 + $0x160] sm:$0xff]
    %v447 = vld [vmem:[#allocation2 + $0x168] sm:$0xff]
    %v448 = vld [vmem:[#allocation2 + $0x170] sm:$0xff]
    %v449 = vld [vmem:[#allocation2 + $0x178] sm:$0xff]
    %v450 = vld [vmem:[#allocation2 + $0x180] sm:$0xff]
    %v451 = vld [vmem:[#allocation2 + $0x188] sm:$0xff]
    %v452 = vld [vmem:[#allocation2 + $0x190] sm:$0xff]
    %453 = vmatpush.msra.mxu0 %v452
    %454 = vmatpush.msra.mxu0 %v451
    %455 = vmatpush.msra.mxu0 %v450
    %456 = vmatpush.msra.mxu0 %v449
    %457 = vmatpush.msra.mxu0 %v448
    %458 = vmatpush.msra.mxu0 %v447
    %459 = vmatpush.msra.mxu0 %v446
    %460 = vmatpush.msra.mxu0 %v445
    %461 = vmatpush.msra.mxu0 %v444
    %462 = vmatpush.msra.mxu0 %v443
    %463 = vmatpush.msra.mxu0 %v442
    %464 = vmatpush.msra.mxu0 %v441
    %465 = vmatpush.msra.mxu0 %v440
    %466 = vmatpush.msra.mxu0 %v439
    %467 = vmatpush.msra.mxu0 %v438
    %468 = vmatpush.msra.mxu0 %v437
    %469 = vmatmul.f32.gmra.mxu0 %v430
    %v470 = vpop.f32.mrf.mxu0
    %v471 = vadd.f32 0.0, %v470
    %472 = vmatmul.f32.gmra.mxu0 %v432
    %v473 = vpop.f32.mrf.mxu0
    %v474 = vadd.f32 0.0, %v473
    %475 = vmatmul.f32.gmra.mxu0 %v434
    %v476 = vpop.f32.mrf.mxu0
    %v477 = vadd.f32 0.0, %v476
    %478 = vmatmul.f32.gmra.mxu0 %v436
    %v479 = vpop.f32.mrf.mxu0
    %v480 = vadd.f32 0.0, %v479
    %481 = vdwg.mxu0
    %v482 = vrcp.pop %v471
    %v483 = vrcp.pop %v474
    %v484 = vrcp.pop %v477
    %v485 = vrcp.pop %v480
    %v486 = vmul.f32 %v430, %v482
    %v487 = vmul.f32 %v432, %v483
    %v488 = vmul.f32 %v434, %v484
    %v489 = vmul.f32 %v436, %v485
    %506 = vrot.lane.b32.xlu0 %v276, 64
    %v507 = vpop.permute.xlu0 %506
    %508 = vrot.lane.b32.xlu0 %v277, 64
    %v509 = vpop.permute.xlu0 %508
    %510 = vrot.lane.b32.xlu0 %v278, 64
    %v511 = vpop.permute.xlu0 %510
    %512 = vrot.lane.b32.xlu0 %v279, 64
    %v513 = vpop.permute.xlu0 %512
    %514 = vrot.lane.b32.xlu0 %v280, 64
    %v515 = vpop.permute.xlu0 %514
    %516 = vrot.lane.b32.xlu0 %v281, 64
    %v517 = vpop.permute.xlu0 %516
    %518 = vrot.lane.b32.xlu0 %v282, 64
    %v519 = vpop.permute.xlu0 %518
    %520 = vrot.lane.b32.xlu0 %v283, 64
    %v521 = vpop.permute.xlu0 %520
    %522 = vrot.lane.b32.xlu0 %v284, 64
    %v523 = vpop.permute.xlu0 %522
    %524 = vrot.lane.b32.xlu0 %v285, 64
    %v525 = vpop.permute.xlu0 %524
    %526 = vrot.lane.b32.xlu0 %v286, 64
    %v527 = vpop.permute.xlu0 %526
    %528 = vrot.lane.b32.xlu0 %v287, 64
    %v529 = vpop.permute.xlu0 %528
    %530 = vrot.lane.b32.xlu0 %v288, 64
    %v531 = vpop.permute.xlu0 %530
    %532 = vrot.lane.b32.xlu0 %v289, 64
    %v533 = vpop.permute.xlu0 %532
    %534 = vrot.lane.b32.xlu0 %v290, 64
    %v535 = vpop.permute.xlu0 %534
    %536 = vrot.lane.b32.xlu0 %v291, 64
    %v537 = vpop.permute.xlu0 %536
    %554 = vmatpush.msra.mxu0 %v537
    %555 = vmatpush.msra.mxu0 %v535
    %556 = vmatpush.msra.mxu0 %v533
    %557 = vmatpush.msra.mxu0 %v531
    %558 = vmatpush.msra.mxu0 %v529
    %559 = vmatpush.msra.mxu0 %v527
    %560 = vmatpush.msra.mxu0 %v525
    %561 = vmatpush.msra.mxu0 %v523
    %562 = vmatpush.msra.mxu0 %v521
    %563 = vmatpush.msra.mxu0 %v519
    %564 = vmatpush.msra.mxu0 %v517
    %565 = vmatpush.msra.mxu0 %v515
    %566 = vmatpush.msra.mxu0 %v513
    %567 = vmatpush.msra.mxu0 %v511
    %568 = vmatpush.msra.mxu0 %v509
    %569 = vmatpush.msra.mxu0 %v507
    %570 = vmatmul.f32.gmra.mxu0 %v486
    %v571 = vpop.f32.mrf.mxu0
    %v572 = vadd.f32 0.0, %v571
    %573 = vmatmul.f32.gmra.mxu0 %v487
    %v574 = vpop.f32.mrf.mxu0
    %v575 = vadd.f32 0.0, %v574
    %576 = vmatmul.f32.gmra.mxu0 %v488
    %v577 = vpop.f32.mrf.mxu0
    %v578 = vadd.f32 0.0, %v577
    %579 = vmatmul.f32.gmra.mxu0 %v489
    %v580 = vpop.f32.mrf.mxu0
    %v581 = vadd.f32 0.0, %v580
    %582 = vdwg.mxu0
    %v583 = vld [vmem:[#allocation2 + $0x200] sm:$0x3f]
    %v584 = vld [vmem:[#allocation2 + $0x58] sm:$0xff]
    %v585 = vld [vmem:[#allocation2 + $0x60] sm:$0xff]
    %v586 = vld [vmem:[#allocation2 + $0x68] sm:$0xff]
    %v587 = vld [vmem:[#allocation2 + $0x70] sm:$0xff]
    %v588 = vperm.slane %v583, 0
    %v590 = vsel %vm90, %v572, 0
    %v593 = vsel %vm90, %v575, 0
    %v596 = vsel %vm90, %v578, 0
    %v599 = vsel %vm90, %v581, 0
    %601 = vmatpush.msra.mxu0 0.0
    %602 = vmatpush.msra.mxu0 0.0
    %603 = vmatpush.msra.mxu0 0.0
    %604 = vmatpush.msra.mxu0 0.0
    %605 = vmatpush.msra.mxu0 0.0
    %606 = vmatpush.msra.mxu0 0.0
    %607 = vmatpush.msra.mxu0 0.0
    %608 = vmatpush.msra.mxu0 0.0
    %609 = vmatpush.msra.mxu0 0.0
    %610 = vmatpush.msra.mxu0 0.0
    %611 = vmatpush.msra.mxu0 0.0
    %612 = vmatpush.msra.mxu0 0.0
    %613 = vmatpush.msra.mxu0 %v587
    %614 = vmatpush.msra.mxu0 %v586
    %615 = vmatpush.msra.mxu0 %v585
    %616 = vmatpush.msra.mxu0 %v584
    %617 = vmatmul.f32.gmra.mxu0 %v590
    %v618 = vpop.f32.mrf.mxu0
    %v619 = vadd.f32 %v588, %v618
    %620 = vmatmul.f32.gmra.mxu0 %v593
    %v621 = vpop.f32.mrf.mxu0
    %v622 = vadd.f32 %v588, %v621
    %623 = vmatmul.f32.gmra.mxu0 %v596
    %v624 = vpop.f32.mrf.mxu0
    %v625 = vadd.f32 %v588, %v624
    %626 = vmatmul.f32.gmra.mxu0 %v599
    %v627 = vpop.f32.mrf.mxu0
    %v628 = vadd.f32 %v588, %v627
    %629 = vdwg.mxu0
    %v630 = vadd.f32 %v73, %v619
    %v631 = vadd.f32 %v76, %v622
    %v632 = vadd.f32 %v79, %v625
    %v633 = vadd.f32 %v82, %v628
    %v634 = vsel %vm90, %v630, 0.0
    %635 = vadd.xlane.f32.xlu0 %v634
    %v636 = vpop.xlane.xlu0 %635
    %v637 = vsel %vm90, %v631, 0.0
    %638 = vadd.xlane.f32.xlu0 %v637
    %v639 = vpop.xlane.xlu0 %638
    %v640 = vsel %vm90, %v632, 0.0
    %641 = vadd.xlane.f32.xlu0 %v640
    %v642 = vpop.xlane.xlu0 %641
    %v643 = vsel %vm90, %v633, 0.0
    %644 = vadd.xlane.f32.xlu0 %v643
    %v645 = vpop.xlane.xlu0 %644
    %v646 = vrcp.pop 32.0
    %v647 = vmul.f32 32.0, %v646
    %v648 = vsub.f32 1.0, %v647
    %v649 = vmul.f32 %v646, %v648
    %v650 = vadd.f32 %v646, %v649
    %vm651 = vweird.f32 %v646
    %v652 = vsel %vm651, %v646, %v650
    %v653 = vmul.f32 %v636, %v652
    %v654 = vmul.f32 %v639, %v652
    %v655 = vmul.f32 %v642, %v652
    %v656 = vmul.f32 %v645, %v652
    %v657 = vsub.f32 %v630, %v653
    %v658 = vsub.f32 %v631, %v654
    %v659 = vsub.f32 %v632, %v655
    %v660 = vsub.f32 %v633, %v656
    %v661 = vmul.f32 %v657, %v657
    %v662 = vmul.f32 %v658, %v658
    %v663 = vmul.f32 %v659, %v659
    %v664 = vmul.f32 %v660, %v660
    %v665 = vsel %vm90, %v661, 0.0
    %666 = vadd.xlane.f32.xlu0 %v665
    %v667 = vpop.xlane.xlu0 %666
    %v668 = vsel %vm90, %v662, 0.0
    %669 = vadd.xlane.f32.xlu0 %v668
    %v670 = vpop.xlane.xlu0 %669
    %v671 = vsel %vm90, %v663, 0.0
    %672 = vadd.xlane.f32.xlu0 %v671
    %v673 = vpop.xlane.xlu0 %672
    %v674 = vsel %vm90, %v664, 0.0
    %675 = vadd.xlane.f32.xlu0 %v674
    %v676 = vpop.xlane.xlu0 %675
    %v677 = vmul.f32 %v667, %v652
    %v678 = vmul.f32 %v670, %v652
    %v679 = vmul.f32 %v673, %v652
    %v680 = vmul.f32 %v676, %v652
    %v681 = vadd.f32 %v677, 1e-05
    %v682 = vadd.f32 %v678, 1e-05
    %v683 = vadd.f32 %v679, 1e-05
    %v684 = vadd.f32 %v680, 1e-05
    %v685 = vrsqrt.pop %v681
    %v686 = vmul.f32 %v685, %v681
    %v687 = vmul.f32 %v686, %v685
    %v688 = vmul.f32 0.5, %v687
    %v689 = vsub.f32 1.5, %v688
    %v690 = vmul.f32 %v685, %v689
    %vm691 = vweird.f32 %v681
    %vm692 = vweird.f32 %v685
    %vm693 = vmor %vm691, %vm692
    %v694 = vsel %vm693, %v685, %v690
    %v695 = vrsqrt.pop %v682
    %v696 = vmul.f32 %v695, %v682
    %v697 = vmul.f32 %v696, %v695
    %v698 = vmul.f32 0.5, %v697
    %v699 = vsub.f32 1.5, %v698
    %v700 = vmul.f32 %v695, %v699
    %vm701 = vweird.f32 %v682
    %vm702 = vweird.f32 %v695
    %vm703 = vmor %vm701, %vm702
    %v704 = vsel %vm703, %v695, %v700
    %v705 = vrsqrt.pop %v683
    %v706 = vmul.f32 %v705, %v683
    %v707 = vmul.f32 %v706, %v705
    %v708 = vmul.f32 0.5, %v707
    %v709 = vsub.f32 1.5, %v708
    %v710 = vmul.f32 %v705, %v709
    %vm711 = vweird.f32 %v683
    %vm712 = vweird.f32 %v705
    %vm713 = vmor %vm711, %vm712
    %v714 = vsel %vm713, %v705, %v710
    %v715 = vrsqrt.pop %v684
    %v716 = vmul.f32 %v715, %v684
    %v717 = vmul.f32 %v716, %v715
    %v718 = vmul.f32 0.5, %v717
    %v719 = vsub.f32 1.5, %v718
    %v720 = vmul.f32 %v715, %v719
    %vm721 = vweird.f32 %v684
    %vm722 = vweird.f32 %v715
    %vm723 = vmor %vm721, %vm722
    %v724 = vsel %vm723, %v715, %v720
    %v725 = vmul.f32 %v657, %v694
    %v726 = vmul.f32 %v658, %v704
    %v727 = vmul.f32 %v659, %v714
    %v728 = vmul.f32 %v660, %v724
    %v729 = vperm.slane %v583, 1
    %v730 = vmul.f32 %v725, %v729
    %v731 = vmul.f32 %v726, %v729
    %v732 = vmul.f32 %v727, %v729
    %v733 = vmul.f32 %v728, %v729
    %v734 = vperm.slane %v583, 2
    %v735 = vadd.f32 %v730, %v734
    %v736 = vadd.f32 %v731, %v734
    %v737 = vadd.f32 %v732, %v734
    %v738 = vadd.f32 %v733, %v734
    %v739 = vld [vmem:[#allocation2 + $0x198] sm:$0xff]
    %v740 = vld [vmem:[#allocation2 + $0x1a0] sm:$0xff]
    %v741 = vld [vmem:[#allocation2 + $0x1a8] sm:$0xff]
    %v742 = vld [vmem:[#allocation2 + $0x1b0] sm:$0xff]
    %v743 = vld [vmem:[#allocation2 + $0x1b8] sm:$0x1]
    %v744 = vperm.slane %v743, 0
    %v746 = vsel %vm90, %v735, 0
    %v749 = vsel %vm90, %v736, 0
    %v752 = vsel %vm90, %v737, 0
    %v755 = vsel %vm90, %v738, 0
    %757 = vmatpush.msra.mxu0 0.0
    %758 = vmatpush.msra.mxu0 0.0
    %759 = vmatpush.msra.mxu0 0.0
    %760 = vmatpush.msra.mxu0 0.0
    %761 = vmatpush.msra.mxu0 0.0
    %762 = vmatpush.msra.mxu0 0.0
    %763 = vmatpush.msra.mxu0 0.0
    %764 = vmatpush.msra.mxu0 0.0
    %765 = vmatpush.msra.mxu0 0.0
    %766 = vmatpush.msra.mxu0 0.0
    %767 = vmatpush.msra.mxu0 0.0
    %768 = vmatpush.msra.mxu0 0.0
    %769 = vmatpush.msra.mxu0 %v742
    %770 = vmatpush.msra.mxu0 %v741
    %771 = vmatpush.msra.mxu0 %v740
    %772 = vmatpush.msra.mxu0 %v739
    %773 = vmatmul.f32.gmra.mxu0 %v746
    %v774 = vpop.f32.mrf.mxu0
    %v775 = vadd.f32 %v744, %v774
    %776 = vmatmul.f32.gmra.mxu0 %v749
    %v777 = vpop.f32.mrf.mxu0
    %v778 = vadd.f32 %v744, %v777
    %779 = vmatmul.f32.gmra.mxu0 %v752
    %v780 = vpop.f32.mrf.mxu0
    %v781 = vadd.f32 %v744, %v780
    %782 = vmatmul.f32.gmra.mxu0 %v755
    %v783 = vpop.f32.mrf.mxu0
    %v784 = vadd.f32 %v744, %v783
    %785 = vdwg.mxu0
    %v786 = vmul.f32 %v775, 0.5
    %v787 = vmul.f32 %v778, 0.5
    %v788 = vmul.f32 %v781, 0.5
    %v789 = vmul.f32 %v784, 0.5
    %v790 = vmul.f32 %v775, 0.70710677
    %v791 = vmul.f32 %v778, 0.70710677
    %v792 = vmul.f32 %v781, 0.70710677
    %v793 = vmul.f32 %v784, 0.70710677
    %v794 = vand.u32 2147483647, %v790
    %v795 = vand.u32 2147483647, %v791
    %v796 = vand.u32 2147483647, %v792
    %v797 = vand.u32 2147483647, %v793
    %v798 = vmul.f32 %v794, 0.3275911
    %v799 = vmul.f32 %v795, 0.3275911
    %v800 = vmul.f32 %v796, 0.3275911
    %v801 = vmul.f32 %v797, 0.3275911
    %v802 = vadd.f32 %v798, 1.0
    %v803 = vadd.f32 %v799, 1.0
    %v804 = vadd.f32 %v800, 1.0
    %v805 = vadd.f32 %v801, 1.0
    %v806 = vrcp.pop %v802
    %v807 = vmul.f32 %v802, %v806
    %v808 = vsub.f32 1.0, %v807
    %v809 = vmul.f32 %v806, %v808
    %v810 = vadd.f32 %v806, %v809
    %vm811 = vweird.f32 %v802
    %vm812 = vweird.f32 %v806
    %vm813 = vmor %vm811, %vm812
    %v814 = vsel %vm813, %v806, %v810
    %v815 = vand.u32 2147483647, %v802
    %vm816 = vcmp.eq.f32.partialorder %v815, 8.507059e+37
    %v817 = vand.u32 %v802, 2147483648
    %v818 = vor.u32 1.1754944e-38, %v817
    %v819 = vsel %vm816, %v818, %v814
    %v820 = vmul.f32 1.0, %v819
    %v821 = vrcp.pop %v803
    %v822 = vmul.f32 %v803, %v821
    %v823 = vsub.f32 1.0, %v822
    %v824 = vmul.f32 %v821, %v823
    %v825 = vadd.f32 %v821, %v824
    %vm826 = vweird.f32 %v803
    %vm827 = vweird.f32 %v821
    %vm828 = vmor %vm826, %vm827
    %v829 = vsel %vm828, %v821, %v825
    %v830 = vand.u32 2147483647, %v803
    %vm831 = vcmp.eq.f32.partialorder %v830, 8.507059e+37
    %v832 = vand.u32 %v803, 2147483648
    %v833 = vor.u32 1.1754944e-38, %v832
    %v834 = vsel %vm831, %v833, %v829
    %v835 = vmul.f32 1.0, %v834
    %v836 = vrcp.pop %v804
    %v837 = vmul.f32 %v804, %v836
    %v838 = vsub.f32 1.0, %v837
    %v839 = vmul.f32 %v836, %v838
    %v840 = vadd.f32 %v836, %v839
    %vm841 = vweird.f32 %v804
    %vm842 = vweird.f32 %v836
    %vm843 = vmor %vm841, %vm842
    %v844 = vsel %vm843, %v836, %v840
    %v845 = vand.u32 2147483647, %v804
    %vm846 = vcmp.eq.f32.partialorder %v845, 8.507059e+37
    %v847 = vand.u32 %v804, 2147483648
    %v848 = vor.u32 1.1754944e-38, %v847
    %v849 = vsel %vm846, %v848, %v844
    %v850 = vmul.f32 1.0, %v849
    %v851 = vrcp.pop %v805
    %v852 = vmul.f32 %v805, %v851
    %v853 = vsub.f32 1.0, %v852
    %v854 = vmul.f32 %v851, %v853
    %v855 = vadd.f32 %v851, %v854
    %vm856 = vweird.f32 %v805
    %vm857 = vweird.f32 %v851
    %vm858 = vmor %vm856, %vm857
    %v859 = vsel %vm858, %v851, %v855
    %v860 = vand.u32 2147483647, %v805
    %vm861 = vcmp.eq.f32.partialorder %v860, 8.507059e+37
    %v862 = vand.u32 %v805, 2147483648
    %v863 = vor.u32 1.1754944e-38, %v862
    %v864 = vsel %vm861, %v863, %v859
    %v865 = vmul.f32 1.0, %v864
    %v866 = vmul.f32 %v820, 1.0614054
    %v867 = vmul.f32 %v835, 1.0614054
    %v868 = vmul.f32 %v850, 1.0614054
    %v869 = vmul.f32 %v865, 1.0614054
    %v870 = vsub.f32 %v866, 1.4531521
    %v871 = vsub.f32 %v867, 1.4531521
    %v872 = vsub.f32 %v868, 1.4531521
    %v873 = vsub.f32 %v869, 1.4531521
    %v874 = vmul.f32 %v870, %v820
    %v875 = vmul.f32 %v871, %v835
    %v876 = vmul.f32 %v872, %v850
    %v877 = vmul.f32 %v873, %v865
    %v878 = vadd.f32 %v874, 1.4214138
    %v879 = vadd.f32 %v875, 1.4214138
    %v880 = vadd.f32 %v876, 1.4214138
    %v881 = vadd.f32 %v877, 1.4214138
    %v882 = vmul.f32 %v878, %v820
    %v883 = vmul.f32 %v879, %v835
    %v884 = vmul.f32 %v880, %v850
    %v885 = vmul.f32 %v881, %v865
    %v886 = vsub.f32 %v882, 0.28449672
    %v887 = vsub.f32 %v883, 0.28449672
    %v888 = vsub.f32 %v884, 0.28449672
    %v889 = vsub.f32 %v885, 0.28449672
    %v890 = vmul.f32 %v886, %v820
    %v891 = vmul.f32 %v887, %v835
    %v892 = vmul.f32 %v888, %v850
    %v893 = vmul.f32 %v889, %v865
    %v894 = vadd.f32 %v890, 0.2548296
    %v895 = vadd.f32 %v891, 0.2548296
    %v896 = vadd.f32 %v892, 0.2548296
    %v897 = vadd.f32 %v893, 0.2548296
    %v898 = vmul.f32 %v894, %v820
    %v899 = vmul.f32 %v895, %v835
    %v900 = vmul.f32 %v896, %v850
    %v901 = vmul.f32 %v897, %v865
    %v902 = vsub.f32 0.0, %v794
    %v903 = vsub.f32 0.0, %v795
    %v904 = vsub.f32 0.0, %v796
    %v905 = vsub.f32 0.0, %v797
    %v906 = vmul.f32 %v902, %v794
    %v907 = vmul.f32 %v903, %v795
    %v908 = vmul.f32 %v904, %v796
    %v909 = vmul.f32 %v905, %v797
    %v910 = vmul.f32 %v906, 1.442695
    %v911 = vpow.pop %v910
    %v912 = vmul.f32 %v907, 1.442695
    %v913 = vpow.pop %v912
    %v914 = vmul.f32 %v908, 1.442695
    %v915 = vpow.pop %v914
    %v916 = vmul.f32 %v909, 1.442695
    %v917 = vpow.pop %v916
    %v918 = vmul.f32 %v898, %v911
    %v919 = vmul.f32 %v899, %v913
    %v920 = vmul.f32 %v900, %v915
    %v921 = vmul.f32 %v901, %v917
    %v922 = vsub.f32 1.0, %v918
    %v923 = vsub.f32 1.0, %v919
    %v924 = vsub.f32 1.0, %v920
    %v925 = vsub.f32 1.0, %v921
    %vm926 = vcmp.lt.f32.partialorder %v790, 0.0
    %vm927 = vcmp.lt.f32.partialorder %v791, 0.0
    %vm928 = vcmp.lt.f32.partialorder %v792, 0.0
    %vm929 = vcmp.lt.f32.partialorder %v793, 0.0
    %v930 = vsub.f32 0.0, %v922
    %v931 = vsub.f32 0.0, %v923
    %v932 = vsub.f32 0.0, %v924
    %v933 = vsub.f32 0.0, %v925
    %v934 = vsel %vm926, %v930, %v922
    %v935 = vsel %vm927, %v931, %v923
    %v936 = vsel %vm928, %v932, %v924
    %v937 = vsel %vm929, %v933, %v925
    %v938 = vadd.f32 %v934, 1.0
    %v939 = vadd.f32 %v935, 1.0
    %v940 = vadd.f32 %v936, 1.0
    %v941 = vadd.f32 %v937, 1.0
    %v942 = vmul.f32 %v786, %v938
    %v943 = vmul.f32 %v787, %v939
    %v944 = vmul.f32 %v788, %v940
    %v945 = vmul.f32 %v789, %v941
    %v946 = vld [vmem:[#allocation2 + $0x1c0] sm:$0xff]
    %v947 = vld [vmem:[#allocation2 + $0x1c8] sm:$0xff]
    %v948 = vld [vmem:[#allocation2 + $0x1d0] sm:$0xff]
    %v949 = vld [vmem:[#allocation2 + $0x1d8] sm:$0xff]
    %v950 = vld [vmem:[#allocation2 + $0x1e0] sm:$0xff]
    %v951 = vld [vmem:[#allocation2 + $0x1e8] sm:$0xff]
    %v952 = vld [vmem:[#allocation2 + $0x1f0] sm:$0xff]
    %v953 = vld [vmem:[#allocation2 + $0x1f8] sm:$0xff]
    %v954 = vperm.slane %v583, 3
    %vm955 = vcmask 523264
    %v957 = vsel %vm955, %v942, 0
    %v960 = vsel %vm955, %v943, 0
    %v963 = vsel %vm955, %v944, 0
    %v966 = vsel %vm955, %v945, 0
    %968 = vmatpush.msra.mxu0 0.0
    %969 = vmatpush.msra.mxu0 0.0
    %970 = vmatpush.msra.mxu0 0.0
    %971 = vmatpush.msra.mxu0 0.0
    %972 = vmatpush.msra.mxu0 0.0
    %973 = vmatpush.msra.mxu0 0.0
    %974 = vmatpush.msra.mxu0 0.0
    %975 = vmatpush.msra.mxu0 0.0
    %976 = vmatpush.msra.mxu0 %v953
    %977 = vmatpush.msra.mxu0 %v952
    %978 = vmatpush.msra.mxu0 %v951
    %979 = vmatpush.msra.mxu0 %v950
    %980 = vmatpush.msra.mxu0 %v949
    %981 = vmatpush.msra.mxu0 %v948
    %982 = vmatpush.msra.mxu0 %v947
    %983 = vmatpush.msra.mxu0 %v946
    %984 = vmatmul.f32.gmra.mxu0 %v957
    %v985 = vpop.f32.mrf.mxu0
    %v986 = vadd.f32 %v954, %v985
    %987 = vmatmul.f32.gmra.mxu0 %v960
    %v988 = vpop.f32.mrf.mxu0
    %v989 = vadd.f32 %v954, %v988
    %990 = vmatmul.f32.gmra.mxu0 %v963
    %v991 = vpop.f32.mrf.mxu0
    %v992 = vadd.f32 %v954, %v991
    %993 = vmatmul.f32.gmra.mxu0 %v966
    %v994 = vpop.f32.mrf.mxu0
    %v995 = vadd.f32 %v954, %v994
    %996 = vdwg.mxu0
    %v997 = vadd.f32 %v735, %v986
    %v998 = vadd.f32 %v736, %v989
    %v999 = vadd.f32 %v737, %v992
    %v1000 = vadd.f32 %v738, %v995
    %v1001 = vsel %vm90, %v997, 0.0
    %1002 = vadd.xlane.f32.xlu0 %v1001
    %v1003 = vpop.xlane.xlu0 %1002
    %v1004 = vsel %vm90, %v998, 0.0
    %1005 = vadd.xlane.f32.xlu0 %v1004
    %v1006 = vpop.xlane.xlu0 %1005
    %v1007 = vsel %vm90, %v999, 0.0
    %1008 = vadd.xlane.f32.xlu0 %v1007
    %v1009 = vpop.xlane.xlu0 %1008
    %v1010 = vsel %vm90, %v1000, 0.0
    %1011 = vadd.xlane.f32.xlu0 %v1010
    %v1012 = vpop.xlane.xlu0 %1011
    %v1013 = vmul.f32 %v1003, %v652
    %v1014 = vmul.f32 %v1006, %v652
    %v1015 = vmul.f32 %v1009, %v652
    %v1016 = vmul.f32 %v1012, %v652
    %v1017 = vsub.f32 %v997, %v1013
    %v1018 = vsub.f32 %v998, %v1014
    %v1019 = vsub.f32 %v999, %v1015
    %v1020 = vsub.f32 %v1000, %v1016
    %v1021 = vmul.f32 %v1017, %v1017
    %v1022 = vmul.f32 %v1018, %v1018
    %v1023 = vmul.f32 %v1019, %v1019
    %v1024 = vmul.f32 %v1020, %v1020
    %v1025 = vsel %vm90, %v1021, 0.0
    %1026 = vadd.xlane.f32.xlu0 %v1025
    %v1027 = vpop.xlane.xlu0 %1026
    %v1028 = vsel %vm90, %v1022, 0.0
    %1029 = vadd.xlane.f32.xlu0 %v1028
    %v1030 = vpop.xlane.xlu0 %1029
    %v1031 = vsel %vm90, %v1023, 0.0
    %1032 = vadd.xlane.f32.xlu0 %v1031
    %v1033 = vpop.xlane.xlu0 %1032
    %v1034 = vsel %vm90, %v1024, 0.0
    %1035 = vadd.xlane.f32.xlu0 %v1034
    %v1036 = vpop.xlane.xlu0 %1035
    %v1037 = vmul.f32 %v1027, %v652
    %v1038 = vmul.f32 %v1030, %v652
    %v1039 = vmul.f32 %v1033, %v652
    %v1040 = vmul.f32 %v1036, %v652
    %v1041 = vadd.f32 %v1037, 1e-05
    %v1042 = vadd.f32 %v1038, 1e-05
    %v1043 = vadd.f32 %v1039, 1e-05
    %v1044 = vadd.f32 %v1040, 1e-05
    %v1045 = vrsqrt.pop %v1041
    %v1046 = vmul.f32 %v1045, %v1041
    %v1047 = vmul.f32 %v1046, %v1045
    %v1048 = vmul.f32 0.5, %v1047
    %v1049 = vsub.f32 1.5, %v1048
    %v1050 = vmul.f32 %v1045, %v1049
    %vm1051 = vweird.f32 %v1041
    %vm1052 = vweird.f32 %v1045
    %vm1053 = vmor %vm1051, %vm1052
    %v1054 = vsel %vm1053, %v1045, %v1050
    %v1055 = vrsqrt.pop %v1042
    %v1056 = vmul.f32 %v1055, %v1042
    %v1057 = vmul.f32 %v1056, %v1055
    %v1058 = vmul.f32 0.5, %v1057
    %v1059 = vsub.f32 1.5, %v1058
    %v1060 = vmul.f32 %v1055, %v1059
    %vm1061 = vweird.f32 %v1042
    %vm1062 = vweird.f32 %v1055
    %vm1063 = vmor %vm1061, %vm1062
    %v1064 = vsel %vm1063, %v1055, %v1060
    %v1065 = vrsqrt.pop %v1043
    %v1066 = vmul.f32 %v1065, %v1043
    %v1067 = vmul.f32 %v1066, %v1065
    %v1068 = vmul.f32 0.5, %v1067
    %v1069 = vsub.f32 1.5, %v1068
    %v1070 = vmul.f32 %v1065, %v1069
    %vm1071 = vweird.f32 %v1043
    %vm1072 = vweird.f32 %v1065
    %vm1073 = vmor %vm1071, %vm1072
    %v1074 = vsel %vm1073, %v1065, %v1070
    %v1075 = vrsqrt.pop %v1044
    %v1076 = vmul.f32 %v1075, %v1044
    %v1077 = vmul.f32 %v1076, %v1075
    %v1078 = vmul.f32 0.5, %v1077
    %v1079 = vsub.f32 1.5, %v1078
    %v1080 = vmul.f32 %v1075, %v1079
    %vm1081 = vweird.f32 %v1044
    %vm1082 = vweird.f32 %v1075
    %vm1083 = vmor %vm1081, %vm1082
    %v1084 = vsel %vm1083, %v1075, %v1080
    %v1085 = vmul.f32 %v1017, %v1054
    %v1086 = vmul.f32 %v1018, %v1064
    %v1087 = vmul.f32 %v1019, %v1074
    %v1088 = vmul.f32 %v1020, %v1084
    %v1089 = vperm.slane %v583, 4
    %v1090 = vmul.f32 %v1085, %v1089
    %v1091 = vmul.f32 %v1086, %v1089
    %v1092 = vmul.f32 %v1087, %v1089
    %v1093 = vmul.f32 %v1088, %v1089
    %v1094 = vperm.slane %v583, 5
    %v1095 = vadd.f32 %v1090, %v1094
    %v1096 = vadd.f32 %v1091, %v1094
    %v1097 = vadd.f32 %v1092, %v1094
    %v1098 = vadd.f32 %v1093, %v1094
    %v1099 = vld [vmem:[#allocation2 + $0x208] sm:$0x3]
    %v1101 = vsel %vm90, %v1099, 0
    %1103 = vmatpush.msra.mxu0 0.0
    %1104 = vmatpush.msra.mxu0 0.0
    %1105 = vmatpush.msra.mxu0 0.0
    %1106 = vmatpush.msra.mxu0 0.0
    %1107 = vmatpush.msra.mxu0 0.0
    %1108 = vmatpush.msra.mxu0 0.0
    %1109 = vmatpush.msra.mxu0 0.0
    %1110 = vmatpush.msra.mxu0 0.0
    %1111 = vmatpush.msra.mxu0 0.0
    %1112 = vmatpush.msra.mxu0 0.0
    %1113 = vmatpush.msra.mxu0 0.0
    %1114 = vmatpush.msra.mxu0 0.0
    %1115 = vmatpush.msra.mxu0 %v1098
    %1116 = vmatpush.msra.mxu0 %v1097
    %1117 = vmatpush.msra.mxu0 %v1096
    %1118 = vmatpush.msra.mxu0 %v1095
    %1119 = vmatmul.f32.gmra.mxu0 %v1101
    %v1120 = vpop.f32.mrf.mxu0
    %v1121 = vadd.f32 0.0, %v1120
    %1122 = vdwg.mxu0
    %v1123 = vmul.f32 %v1121, 0.5
    %v1124 = vmul.f32 %v1121, 0.70710677
    %v1125 = vand.u32 2147483647, %v1124
    %v1126 = vmul.f32 %v1125, 0.3275911
    %v1127 = vadd.f32 %v1126, 1.0
    %v1128 = vrcp.pop %v1127
    %v1129 = vmul.f32 %v1127, %v1128
    %v1130 = vsub.f32 1.0, %v1129
    %v1131 = vmul.f32 %v1128, %v1130
    %v1132 = vadd.f32 %v1128, %v1131
    %vm1133 = vweird.f32 %v1127
    %vm1134 = vweird.f32 %v1128
    %vm1135 = vmor %vm1133, %vm1134
    %v1136 = vsel %vm1135, %v1128, %v1132
    %v1137 = vand.u32 2147483647, %v1127
    %vm1138 = vcmp.eq.f32.partialorder %v1137, 8.507059e+37
    %v1139 = vand.u32 %v1127, 2147483648
    %v1140 = vor.u32 1.1754944e-38, %v1139
    %v1141 = vsel %vm1138, %v1140, %v1136
    %v1142 = vmul.f32 1.0, %v1141
    %v1143 = vmul.f32 %v1142, 1.0614054
    %v1144 = vsub.f32 %v1143, 1.4531521
    %v1145 = vmul.f32 %v1144, %v1142
    %v1146 = vadd.f32 %v1145, 1.4214138
    %v1147 = vmul.f32 %v1146, %v1142
    %v1148 = vsub.f32 %v1147, 0.28449672
    %v1149 = vmul.f32 %v1148, %v1142
    %v1150 = vadd.f32 %v1149, 0.2548296
    %v1151 = vmul.f32 %v1150, %v1142
    %v1152 = vsub.f32 0.0, %v1125
    %v1153 = vmul.f32 %v1152, %v1125
    %v1154 = vmul.f32 %v1153, 1.442695
    %v1155 = vpow.pop %v1154
    %v1156 = vmul.f32 %v1151, %v1155
    %v1157 = vsub.f32 1.0, %v1156
    %vm1158 = vcmp.lt.f32.partialorder %v1124, 0.0
    %v1159 = vsub.f32 0.0, %v1157
    %v1160 = vsel %vm1158, %v1159, %v1157
    %v1161 = vadd.f32 %v1160, 1.0
    %v1162 = vmul.f32 %v1123, %v1161
    %v1163 = vld [vmem:[#allocation2 + $0x210] sm:$0xff]
    %v1164 = vld [vmem:[#allocation2 + $0x218] sm:$0xff]
    %v1165 = vld [vmem:[#allocation2 + $0x220] sm:$0xff]
    %v1166 = vld [vmem:[#allocation2 + $0x228] sm:$0xff]
    %v1168 = vsel %vm90, %v1162, 0
    %1170 = vmatpush.msra.mxu0 0.0
    %1171 = vmatpush.msra.mxu0 0.0
    %1172 = vmatpush.msra.mxu0 0.0
    %1173 = vmatpush.msra.mxu0 0.0
    %1174 = vmatpush.msra.mxu0 0.0
    %1175 = vmatpush.msra.mxu0 0.0
    %1176 = vmatpush.msra.mxu0 0.0
    %1177 = vmatpush.msra.mxu0 0.0
    %1178 = vmatpush.msra.mxu0 0.0
    %1179 = vmatpush.msra.mxu0 0.0
    %1180 = vmatpush.msra.mxu0 0.0
    %1181 = vmatpush.msra.mxu0 0.0
    %1182 = vmatpush.msra.mxu0 %v1166
    %1183 = vmatpush.msra.mxu0 %v1165
    %1184 = vmatpush.msra.mxu0 %v1164
    %1185 = vmatpush.msra.mxu0 %v1163
    %1186 = vmatmul.f32.gmra.mxu0 %v1168
    %v1187 = vpop.f32.mrf.mxu0
    %v1188 = vadd.f32 0.0, %v1187
    %1189 = vdwg.mxu0
    %1190 = vst [vmem:[#allocation5] sm:$0x3] %v1188
    // Predicated region
    $region14: #{tpu_custom_call.1} parent=1 // pred_check
      _
    $region15: #{tpu_custom_call.1} parent=1 // pred_check_branch
      %1192 = sbr.rel (0) target = $region17
    $region16: #{tpu_custom_call.1} parent=1 // pred_region
      %1194 = vsyncadd [#allocation4], 0
      %s1196 = sshll.u32 [#allocation5], 4
      %s1197 = int_to_ptr.vmem [resolvable:$true] %s1196
      %s1198 = sshll.u32 %s2, 4
      %s1199 = int_to_ptr.hbm [resolvable:$true] %s1198
      %1201 = dma.vmem_to_hbm [thread:$0]  %s1197, 32, %s1199, [#allocation4]
    $region17: #{tpu_custom_call.1} parent=1 // pred_fallthru
      _
    // Predicated region
    $region18: #{tpu_custom_call.1} parent=1 // pred_check
      _
    $region19: #{tpu_custom_call.1} parent=1 // pred_check_branch
      %1203 = sbr.rel (0) target = $region21
    $region20: #{tpu_custom_call.1} parent=1 // pred_region
      %1205 = dma.done [#allocation4], 32
    $region21: #{tpu_custom_call.1} parent=1 // pred_fallthru
      _
    %1206 = vsyncpa [#allocation3], 1
    %1207 = vsyncpa [#allocation4], 1

</llo_original>
